<compile_context>
chip_gen: v5e
topology: v5e:2x2
jax: 0.10.0
libtpu: 0.0.40
codegen_flags: <defaults>
</compile_context>

<pallas_src>
import jax
import jax.numpy as jnp
from jax import lax
from jax.experimental import pallas as pl
from jax.experimental.pallas import tpu as pltpu
import numpy as np


def _round_up(x, m):
    return (x + m - 1) // m * m


def _make_copy_generator_kernel(n_v: int, tile_v: int, tt: int):
    """Kernel over grid (batch, T-tile, 2*n_v).  Sweep 1 (v < n_v): matmul +
    streaming softmax stats + exp cache.  Sweep 2 (v >= n_v): VPU rescale."""

    def kernel(hidden_ref, wg_ref, bg_ref, wc_ref, bc_ref, attn_ref, srcmap_ref,
               outp_ref, copy_ref,
               acc_s, m_s, l_s, pc_s, mw_s):
        v_step = pl.program_id(2)
        lane = lax.broadcasted_iota(jnp.int32, (tt, n_v), 1)

        # ---- first vocab step of this row tile: init stats + copy gate (VPU)
        @pl.when(v_step == 0)
        def _init():
            m_s[...] = jnp.full_like(m_s, -1e30)     # finite (avoid inf-inf NaN)
            l_s[...] = jnp.zeros_like(l_s)
            mw_s[...] = jnp.zeros_like(mw_s)
            h32 = hidden_ref[0].astype(jnp.float32)                  # [TT, H]
            pc_logit = (jnp.sum(h32 * wc_ref[...], axis=-1, keepdims=True)
                        + bc_ref[0, 0])                              # [TT, 1]
            pc_s[...] = 1.0 / (1.0 + jnp.exp(-pc_logit))             # sigmoid

        # ---- sweep 1: one MXU matmul per vocab tile, cache exp tile in VMEM
        @pl.when(v_step < n_v)
        def _sweep1():
            tile_idx = v_step
            logits = jnp.dot(hidden_ref[0], wg_ref[...],
                             preferred_element_type=jnp.float32) + bg_ref[...]
            m_old = m_s[...]
            m_new = jnp.maximum(m_old, jnp.max(logits, axis=-1, keepdims=True))
            e = jnp.exp(logits - m_new)                              # [TT, TILE_V]
            l_s[...] = (l_s[...] * jnp.exp(m_old - m_new)
                        + jnp.sum(e, axis=-1, keepdims=True))
            acc_s[tile_idx] = e                                      # exp cache
            mw_s[...] = jnp.where(lane == tile_idx, m_new, mw_s[...])
            m_s[...] = m_new

        # ---- sweep 2: pure-VPU rescale of cached exp tiles (no matmul/DMA)
        @pl.when(v_step >= n_v)
        def _sweep2():
            tile_idx = v_step - n_v
            m_v = jnp.sum(jnp.where(lane == tile_idx, mw_s[...], 0.0),
                          axis=-1, keepdims=True)                    # [TT, 1]
            scale = (1.0 - pc_s[...]) / l_s[...]                     # exact divide
            outp_ref[0, :, :] = acc_s[tile_idx] * (jnp.exp(m_v - m_s[...]) * scale)

        # ---- last step: copy distribution (p_copy * attn) @ src_map (f32)
        @pl.when(v_step == 2 * n_v - 1)
        def _copy():
            mul_attn = attn_ref[0] * pc_s[...]                       # [TT, S] f32
            copy_ref[0, :, :] = jnp.dot(mul_attn, srcmap_ref[0],
                                        preferred_element_type=jnp.float32)

    return kernel


def copy_generator_forward(hidden, attn, src_map, Wg, bg, Wc, bc,
                           pad_index: int, eps: float = 1e-20,
                           tile_v_max: int = 4096, tile_t_max: int = 256,
                           vmem_budget_bytes: int = 40 * 1024 * 1024):
    """hidden [B,T,H], attn [B,T,S], src_map [B,S,C]; Wg [V,H], bg [V],
    Wc [1,H], bc [1] follow PyTorch nn.Linear layout.

    Returns (out_v, out_c): lane-dense padded slabs
      out_v [B, T_pad, V_pad]  (valid region [:, :T, :V])
      out_c [B, T_pad, C_pad]  (valid region [:, :T, :C])
    """
    B, T, H = hidden.shape
    _, _, S = attn.shape
    _, _, C = src_map.shape
    V = Wg.shape[0]
    f32 = jnp.float32

    # ---------------- padding / tile sizes ----------------
    H_pad = _round_up(H, 256) if H > 128 else _round_up(H, 8)
    C_pad = _round_up(C, 128)

    TT = min(_round_up(T, 8), _round_up(tile_t_max, 8))
    TILE_V = min(_round_up(V, 128), _round_up(tile_v_max, 128))

    def _vmem_est(tt, tv):
        nv = _round_up(V, tv) // tv
        vpad = nv * tv
        b = tt * vpad * 4                       # exp-cache scratch
        b += 2 * tt * tv * 4                    # vocab out tile (double buffer)
        b += 2 * H_pad * tv * 2                 # Wg tiles (bf16)
        b += 2 * tt * H_pad * 2                 # hidden (bf16)
        b += 2 * tt * S * 4                     # attn (f32)
        b += 2 * S * C_pad * 4                  # src_map (f32)
        b += 2 * tt * C_pad * 4                 # copy out
        b += 2 * tv * 4 + 2 * H_pad * 4         # bg / Wc
        b += tt * 128 * 4 * 4 + (1 << 20)       # small scratch + slack
        return b

    while _vmem_est(TT, TILE_V) > vmem_budget_bytes and (TT > 8 or TILE_V > 128):
        if TT > 8:
            TT = max(8, _round_up(TT // 2, 8))
        else:
            TILE_V = max(128, _round_up(TILE_V // 2, 128))

    T_pad = _round_up(T, TT)
    n_t = T_pad // TT
    V_pad = _round_up(V, TILE_V)
    n_v = V_pad // TILE_V

    # ---------------- host-side prep: padding, masks baked into Wg / bg ------
    hidden_f = jnp.asarray(hidden, f32)
    attn_f = jnp.asarray(attn, f32)
    if T_pad != T:
        hidden_f = jnp.pad(hidden_f, ((0, 0), (0, T_pad - T), (0, 0)))
        attn_f = jnp.pad(attn_f, ((0, 0), (0, T_pad - T), (0, 0)))
    if H_pad != H:
        hidden_f = jnp.pad(hidden_f, ((0, 0), (0, 0), (0, H_pad - H)))
    hidden_bf = hidden_f.astype(jnp.bfloat16)

    srcmap_f = jnp.asarray(src_map, f32)
    if C_pad != C:
        srcmap_f = jnp.pad(srcmap_f, ((0, 0), (0, 0), (0, C_pad - C)))

    Wg_t = jnp.asarray(Wg, f32).T                       # [H, V]
    Wg_t = Wg_t.at[:, pad_index].set(0.0)               # bake pad mask: logit = bg
    bg_1d = jnp.asarray(bg, f32).at[pad_index].set(-float(eps))
    if H_pad != H:
        Wg_t = jnp.pad(Wg_t, ((0, H_pad - H), (0, 0)))
    if V_pad != V:
        Wg_t = jnp.pad(Wg_t, ((0, 0), (0, V_pad - V)))
        bg_1d = jnp.pad(bg_1d, (0, V_pad - V), constant_values=-1e30)  # pad cols out
    Wg_bf = Wg_t.astype(jnp.bfloat16)                   # [H_pad, V_pad]
    bg_2d = bg_1d.reshape(1, V_pad)

    Wc_f = jnp.asarray(Wc, f32).reshape(1, H)
    if H_pad != H:
        Wc_f = jnp.pad(Wc_f, ((0, 0), (0, H_pad - H)))
    bc_f = jnp.asarray(bc, f32).reshape(1, 1)           # SMEM scalar

    kernel = _make_copy_generator_kernel(n_v, TILE_V, TT)
    grid = (B, n_t, 2 * n_v)
    vmem_limit = int(min(max(2 * _vmem_est(TT, TILE_V), 32 << 20), 56 << 20))

    out_v, out_c = pl.pallas_call(
        kernel,
        out_shape=(jax.ShapeDtypeStruct((B, T_pad, V_pad), f32),
                   jax.ShapeDtypeStruct((B, T_pad, C_pad), f32)),
        grid_spec=pltpu.PrefetchScalarGridSpec(
            num_scalar_prefetch=0,
            grid=grid,
            in_specs=[
                pl.BlockSpec((1, TT, H_pad), lambda b, t, v: (b, t, 0)),   # hidden
                pl.BlockSpec((H_pad, TILE_V),                              # Wg^T tile
                             lambda b, t, v: (0, jnp.minimum(v, n_v - 1))),
                pl.BlockSpec((1, TILE_V),                                  # bg tile
                             lambda b, t, v: (0, jnp.minimum(v, n_v - 1))),
                pl.BlockSpec((1, H_pad), lambda b, t, v: (0, 0)),          # Wc
                pl.BlockSpec(memory_space=pltpu.MemorySpace.SMEM),         # bc
                pl.BlockSpec((1, TT, S), lambda b, t, v: (b, t, 0)),       # attn
                pl.BlockSpec((1, S, C_pad), lambda b, t, v: (b, 0, 0)),    # src_map
            ],
            out_specs=[
                pl.BlockSpec((1, TT, TILE_V),
                             lambda b, t, v: (b, t, jnp.maximum(v - n_v, 0))),
                pl.BlockSpec((1, TT, C_pad), lambda b, t, v: (b, t, 0)),
            ],
            scratch_shapes=[
                pltpu.VMEM((n_v, TT, TILE_V), f32),   # exp cache (sweep-1 tiles)
                pltpu.VMEM((TT, 1), f32),             # running max
                pltpu.VMEM((TT, 1), f32),             # running sum
                pltpu.VMEM((TT, 1), f32),             # p_copy cache
                pltpu.VMEM((TT, n_v), f32),           # per-tile write-time max
            ]),
        compiler_params=pltpu.CompilerParams(
            dimension_semantics=("parallel", "parallel", "arbitrary"),
            vmem_limit_bytes=vmem_limit),
    )(hidden_bf, Wg_bf, bg_2d, Wc_f, bc_f, attn_f, srcmap_f)

    return out_v, out_c


def copy_generator_forward_cat(hidden, attn, src_map, Wg, bg, Wc, bc,
                               pad_index, eps=1e-20, **kw):
    """Exact PyTorch-layout output (cat([out_prob, copy_prob], -1)).  Costs two
    extra full passes over the result (slice + concat) — prefer the two-array
    return of copy_generator_forward on the hot path."""
    B, T, _ = hidden.shape
    V = Wg.shape[0]
    C = src_map.shape[-1]
    out_v, out_c = copy_generator_forward(hidden, attn, src_map, Wg, bg, Wc, bc,
                                          pad_index, eps, **kw)
    return jnp.concatenate([out_v[:, :T, :V], out_c[:, :T, :C]], axis=-1)


def copy_generator_reference(hidden, attn, src_map, Wg, bg, Wc, bc,
                             pad_index, eps=1e-20):
    """Pure-JAX f32 reference mirroring the PyTorch forward."""
    logits = jnp.einsum('bth,vh->btv', hidden, Wg) + bg
    logits = logits.at[:, :, pad_index].set(-eps)
    prob = jax.nn.softmax(logits, axis=-1)
    p_copy = jax.nn.sigmoid(jnp.einsum('bth,oh->bto', hidden, Wc) + bc)   # [B,T,1]
    out_prob = prob * (1.0 - p_copy)
    mul_attn = attn * p_copy
    copy_prob = jnp.einsum('bts,bsc->btc', mul_attn, src_map)
    return jnp.concatenate([out_prob, copy_prob], axis=2)


if __name__ == "__main__":
    # Small shapes chosen to exercise T tiling, multi-tile vocab streaming
    # softmax, vocab padding (V not a multiple of 128) and copy-vocab padding.
    B, T, H, S = 2, 20, 64, 16
    V = 300          # |tgt_dict|  (generator output size)
    C = 50           # extra (copy) vocab size
    pad_index = 3
    eps = 1e-20

    key = jax.random.PRNGKey(0)
    k = jax.random.split(key, 7)

    hidden = jax.random.normal(k[0], (B, T, H), jnp.float32)
    attn = jax.nn.softmax(jax.random.normal(k[1], (B, T, S), jnp.float32), axis=-1)
    src_idx = jax.random.randint(k[2], (B, S), 0, C)
    src_map = jax.nn.one_hot(src_idx, C, dtype=jnp.float32)

    # PyTorch nn.Linear layout: [out, in].
    Wg = 0.05 * jax.random.normal(k[3], (V, H), jnp.float32)
    bg = 0.01 * jax.random.normal(k[4], (V,), jnp.float32)
    Wc = 0.05 * jax.random.normal(k[5], (1, H), jnp.float32)
    bc = 0.01 * jax.random.normal(k[6], (1,), jnp.float32)

    ref = np.asarray(copy_generator_reference(hidden, attn, src_map, Wg, bg, Wc, bc,
                                              pad_index, eps))
    ref_v, ref_c = ref[..., :V], ref[..., V:]

    # Two tilings: single vocab tile (n_v=1) and multi-tile streaming (n_v=3,
    # T tiled into 3 row tiles).
    for tvm, ttm in ((4096, 256), (128, 8)):
        out_v, out_c = copy_generator_forward(hidden, attn, src_map, Wg, bg, Wc, bc,
                                              pad_index, eps,
                                              tile_v_max=tvm, tile_t_max=ttm)
        out_v = jax.block_until_ready(out_v)
        out_c = jax.block_until_ready(out_c)
        # bf16 MXU operands -> compare against the exact f32 reference with
        # bf16-appropriate tolerances (padding sliced off host-side, for free).
        np.testing.assert_allclose(np.asarray(out_v)[:, :T, :V], ref_v,
                                   rtol=2e-2, atol=2e-3)
        np.testing.assert_allclose(np.asarray(out_c)[:, :T, :C], ref_c,
                                   rtol=2e-2, atol=2e-3)

    print("KERNEL_OK")
</pallas_src>

<mosaic_0001>
module attributes {stable_mosaic.version = 11 : i64} {
  func.func @kernel(%arg0: i32, %arg1: i32, %arg2: i32, %arg3: memref<1x24x64xbf16, #tpu.memory_space<vmem>>, %arg4: memref<64x384xbf16, #tpu.memory_space<vmem>>, %arg5: memref<1x384xf32, #tpu.memory_space<vmem>>, %arg6: memref<1x64xf32, #tpu.memory_space<vmem>>, %arg7: memref<1x1xf32, #tpu.memory_space<smem>>, %arg8: memref<1x24x16xf32, #tpu.memory_space<vmem>>, %arg9: memref<1x16x128xf32, #tpu.memory_space<vmem>>, %arg10: memref<1x24x384xf32, #tpu.memory_space<vmem>>, %arg11: memref<1x24x128xf32, #tpu.memory_space<vmem>>, %arg12: memref<1x24x384xf32, #tpu.memory_space<vmem>>, %arg13: memref<24x1xf32, #tpu.memory_space<vmem>>, %arg14: memref<24x1xf32, #tpu.memory_space<vmem>>, %arg15: memref<24x1xf32, #tpu.memory_space<vmem>>, %arg16: memref<24x1xf32, #tpu.memory_space<vmem>>) attributes {dimension_semantics = [#tpu.dimension_semantics<parallel>, #tpu.dimension_semantics<parallel>, #tpu.dimension_semantics<arbitrary>], iteration_bounds = array<i64: 2, 1, 2>, scalar_prefetch = 0 : i64, scratch_operands = 5 : i64, tpu.core_type = #tpu.core_type<tc>, window_params = [{transform_indices = @transform_0, window_bounds = array<i64: 1, 24, 64>}, {transform_indices = @transform_1, window_bounds = array<i64: 64, 384>}, {transform_indices = @transform_2, window_bounds = array<i64: 1, 384>}, {pipeline_mode = #tpu.pipeline_mode<synchronous>, transform_indices = @transform_3, window_bounds = array<i64: 1, 64>}, {transform_indices = @transform_4, window_bounds = array<i64: 1, 1>}, {transform_indices = @transform_5, window_bounds = array<i64: 1, 24, 16>}, {transform_indices = @transform_6, window_bounds = array<i64: 1, 16, 128>}, {transform_indices = @transform_7, window_bounds = array<i64: 1, 24, 384>}, {transform_indices = @transform_8, window_bounds = array<i64: 1, 24, 128>}]} {
    %0 = tpu.iota {dimensions = array<i32: 1>} : vector<24x1xi32>
    %c0_i32 = arith.constant 0 : i32
    %1 = arith.cmpi eq, %arg2, %c0_i32 : i32
    %2 = arith.extui %1 : i1 to i32
    %c0_i32_0 = arith.constant 0 : i32
    %3 = arith.cmpi ne, %2, %c0_i32_0 : i32
    scf.if %3 {
      %cst = arith.constant -1.000000e+30 : f32
      %13 = vector.broadcast %cst : f32 to vector<24x1xf32>
      %c0 = arith.constant 0 : index
      %c0_6 = arith.constant 0 : index
      %14 = vector.load %arg13[%c0, %c0_6] : memref<24x1xf32, #tpu.memory_space<vmem>>, vector<24x1xf32>
      tpu.vector_store %arg13[%c0, %c0_6], %13 {strides = array<i32>} : memref<24x1xf32, #tpu.memory_space<vmem>>, vector<24x1xf32>,
      %cst_7 = arith.constant 0.000000e+00 : f32
      %15 = vector.broadcast %cst_7 : f32 to vector<24x1xf32>
      %c0_8 = arith.constant 0 : index
      %c0_9 = arith.constant 0 : index
      %16 = vector.load %arg14[%c0_8, %c0_9] : memref<24x1xf32, #tpu.memory_space<vmem>>, vector<24x1xf32>
      tpu.vector_store %arg14[%c0_8, %c0_9], %15 {strides = array<i32>} : memref<24x1xf32, #tpu.memory_space<vmem>>, vector<24x1xf32>,
      %cst_10 = arith.constant 0.000000e+00 : f32
      %17 = vector.broadcast %cst_10 : f32 to vector<24x1xf32>
      %c0_11 = arith.constant 0 : index
      %c0_12 = arith.constant 0 : index
      %18 = vector.load %arg16[%c0_11, %c0_12] : memref<24x1xf32, #tpu.memory_space<vmem>>, vector<24x1xf32>
      tpu.vector_store %arg16[%c0_11, %c0_12], %17 {strides = array<i32>} : memref<24x1xf32, #tpu.memory_space<vmem>>, vector<24x1xf32>,
      %c0_13 = arith.constant 0 : index
      %c0_14 = arith.constant 0 : index
      %c0_15 = arith.constant 0 : index
      %19 = vector.load %arg3[%c0_13, %c0_14, %c0_15] : memref<1x24x64xbf16, #tpu.memory_space<vmem>>, vector<1x24x64xbf16>
      %20 = vector.shape_cast %19 : vector<1x24x64xbf16> to vector<24x64xbf16>
      %21 = arith.extf %20 : vector<24x64xbf16> to vector<24x64xf32>
      %c0_16 = arith.constant 0 : index
      %c0_17 = arith.constant 0 : index
      %22 = vector.load %arg6[%c0_16, %c0_17] : memref<1x64xf32, #tpu.memory_space<vmem>>, vector<1x64xf32>
      %23 = vector.broadcast %22 : vector<1x64xf32> to vector<24x64xf32>
      %24 = arith.mulf %21, %23 : vector<24x64xf32>
      %cst_18 = arith.constant dense<0.000000e+00> : vector<24xf32>
      %25 = vector.multi_reduction <add>, %24, %cst_18 [1] : vector<24x64xf32> to vector<24xf32>
      %26 = vector.shape_cast %25 : vector<24xf32> to vector<24x1xf32>
      %c0_19 = arith.constant 0 : index
      %c0_20 = arith.constant 0 : index
      %27 = memref.load %arg7[%c0_19, %c0_20] : memref<1x1xf32, #tpu.memory_space<smem>>
      %28 = vector.broadcast %27 : f32 to vector<24x1xf32>
      %29 = arith.addf %26, %28 : vector<24x1xf32>
      %cst_21 = arith.constant 0.000000e+00 : f32
      %30 = vector.broadcast %cst_21 : f32 to vector<24x1xf32>
      %31 = arith.subf %30, %29 : vector<24x1xf32>
      %32 = math.exp %31 : vector<24x1xf32>
      %cst_22 = arith.constant 1.000000e+00 : f32
      %33 = vector.broadcast %cst_22 : f32 to vector<24x1xf32>
      %34 = arith.addf %33, %32 : vector<24x1xf32>
      %cst_23 = arith.constant 1.000000e+00 : f32
      %35 = vector.broadcast %cst_23 : f32 to vector<24x1xf32>
      %36 = arith.divf %35, %34 : vector<24x1xf32>
      %c0_24 = arith.constant 0 : index
      %c0_25 = arith.constant 0 : index
      %37 = vector.load %arg15[%c0_24, %c0_25] : memref<24x1xf32, #tpu.memory_space<vmem>>, vector<24x1xf32>
      tpu.vector_store %arg15[%c0_24, %c0_25], %36 {strides = array<i32>} : memref<24x1xf32, #tpu.memory_space<vmem>>, vector<24x1xf32>,
    } else {
    }
    %c1_i32 = arith.constant 1 : i32
    %4 = arith.cmpi slt, %arg2, %c1_i32 : i32
    %5 = arith.extui %4 : i1 to i32
    %c0_i32_1 = arith.constant 0 : i32
    %6 = arith.cmpi ne, %5, %c0_i32_1 : i32
    scf.if %6 {
      %c0 = arith.constant 0 : index
      %c0_6 = arith.constant 0 : index
      %c0_7 = arith.constant 0 : index
      %13 = vector.load %arg3[%c0, %c0_6, %c0_7] : memref<1x24x64xbf16, #tpu.memory_space<vmem>>, vector<1x24x64xbf16>
      %14 = vector.shape_cast %13 : vector<1x24x64xbf16> to vector<24x64xbf16>
      %c0_8 = arith.constant 0 : index
      %c0_9 = arith.constant 0 : index
      %15 = vector.load %arg4[%c0_8, %c0_9] : memref<64x384xbf16, #tpu.memory_space<vmem>>, vector<64x384xbf16>
      %cst = arith.constant dense<0.000000e+00> : vector<24x384xf32>
      %16 = tpu.matmul %14, %15, %cst {dimension_numbers = #tpu.dot_dimension_numbers<[1], [0], [0], [1], [0, 0, 1, 1], [], []>} : vector<24x64xbf16>, vector<64x384xbf16>, vector<24x384xf32> -> vector<24x384xf32>
      %c0_10 = arith.constant 0 : index
      %c0_11 = arith.constant 0 : index
      %17 = vector.load %arg5[%c0_10, %c0_11] : memref<1x384xf32, #tpu.memory_space<vmem>>, vector<1x384xf32>
      %18 = vector.broadcast %17 : vector<1x384xf32> to vector<24x384xf32>
      %19 = arith.addf %16, %18 : vector<24x384xf32>
      %c0_12 = arith.constant 0 : index
      %c0_13 = arith.constant 0 : index
      %20 = vector.load %arg13[%c0_12, %c0_13] : memref<24x1xf32, #tpu.memory_space<vmem>>, vector<24x1xf32>
      %cst_14 = arith.constant dense<0xFF800000> : vector<24xf32>
      %21 = vector.multi_reduction <maximumf>, %19, %cst_14 [1] : vector<24x384xf32> to vector<24xf32>
      %22 = vector.shape_cast %21 : vector<24xf32> to vector<24x1xf32>
      %23 = arith.maximumf %20, %22 : vector<24x1xf32>
      %24 = vector.broadcast %23 : vector<24x1xf32> to vector<24x384xf32>
      %25 = arith.subf %19, %24 : vector<24x384xf32>
      %26 = math.exp %25 : vector<24x384xf32>
      %c0_15 = arith.constant 0 : index
      %c0_16 = arith.constant 0 : index
      %27 = vector.load %arg14[%c0_15, %c0_16] : memref<24x1xf32, #tpu.memory_space<vmem>>, vector<24x1xf32>
      %28 = arith.subf %20, %23 : vector<24x1xf32>
      %29 = math.exp %28 : vector<24x1xf32>
      %30 = arith.mulf %27, %29 : vector<24x1xf32>
      %cst_17 = arith.constant dense<0.000000e+00> : vector<24xf32>
      %31 = vector.multi_reduction <add>, %26, %cst_17 [1] : vector<24x384xf32> to vector<24xf32>
      %32 = vector.shape_cast %31 : vector<24xf32> to vector<24x1xf32>
      %33 = arith.addf %30, %32 : vector<24x1xf32>
      %c0_18 = arith.constant 0 : index
      %c0_19 = arith.constant 0 : index
      %34 = vector.load %arg14[%c0_18, %c0_19] : memref<24x1xf32, #tpu.memory_space<vmem>>, vector<24x1xf32>
      tpu.vector_store %arg14[%c0_18, %c0_19], %33 {strides = array<i32>} : memref<24x1xf32, #tpu.memory_space<vmem>>, vector<24x1xf32>,
      %35 = arith.index_cast %arg2 : i32 to index
      %c0_20 = arith.constant 0 : index
      %c0_21 = arith.constant 0 : index
      %36 = vector.load %arg12[%35, %c0_20, %c0_21] : memref<1x24x384xf32, #tpu.memory_space<vmem>>, vector<1x24x384xf32>
      %37 = vector.shape_cast %36 : vector<1x24x384xf32> to vector<24x384xf32>
      %38 = vector.shape_cast %26 : vector<24x384xf32> to vector<1x24x384xf32>
      tpu.vector_store %arg12[%35, %c0_20, %c0_21], %38 {strides = array<i32>} : memref<1x24x384xf32, #tpu.memory_space<vmem>>, vector<1x24x384xf32>,
      %39 = vector.broadcast %arg2 : i32 to vector<24x1xi32>
      %40 = arith.cmpi eq, %0, %39 : vector<24x1xi32>
      %c0_22 = arith.constant 0 : index
      %c0_23 = arith.constant 0 : index
      %41 = vector.load %arg16[%c0_22, %c0_23] : memref<24x1xf32, #tpu.memory_space<vmem>>, vector<24x1xf32>
      %42 = arith.select %40, %23, %41 : vector<24x1xi1>, vector<24x1xf32>
      %c0_24 = arith.constant 0 : index
      %c0_25 = arith.constant 0 : index
      %43 = vector.load %arg16[%c0_24, %c0_25] : memref<24x1xf32, #tpu.memory_space<vmem>>, vector<24x1xf32>
      tpu.vector_store %arg16[%c0_24, %c0_25], %42 {strides = array<i32>} : memref<24x1xf32, #tpu.memory_space<vmem>>, vector<24x1xf32>,
      %c0_26 = arith.constant 0 : index
      %c0_27 = arith.constant 0 : index
      %44 = vector.load %arg13[%c0_26, %c0_27] : memref<24x1xf32, #tpu.memory_space<vmem>>, vector<24x1xf32>
      tpu.vector_store %arg13[%c0_26, %c0_27], %23 {strides = array<i32>} : memref<24x1xf32, #tpu.memory_space<vmem>>, vector<24x1xf32>,
    } else {
    }
    %c1_i32_2 = arith.constant 1 : i32
    %7 = arith.cmpi sge, %arg2, %c1_i32_2 : i32
    %8 = arith.extui %7 : i1 to i32
    %c0_i32_3 = arith.constant 0 : i32
    %9 = arith.cmpi ne, %8, %c0_i32_3 : i32
    scf.if %9 {
      %c1_i32_6 = arith.constant 1 : i32
      %13 = arith.subi %arg2, %c1_i32_6 : i32
      %14 = vector.broadcast %13 : i32 to vector<24x1xi32>
      %15 = arith.cmpi eq, %0, %14 : vector<24x1xi32>
      %c0 = arith.constant 0 : index
      %c0_7 = arith.constant 0 : index
      %16 = vector.load %arg16[%c0, %c0_7] : memref<24x1xf32, #tpu.memory_space<vmem>>, vector<24x1xf32>
      %cst = arith.constant 0.000000e+00 : f32
      %17 = vector.broadcast %cst : f32 to vector<24x1xf32>
      %18 = arith.select %15, %16, %17 : vector<24x1xi1>, vector<24x1xf32>
      %cst_8 = arith.constant dense<0.000000e+00> : vector<24xf32>
      %19 = vector.multi_reduction <add>, %18, %cst_8 [1] : vector<24x1xf32> to vector<24xf32>
      %20 = vector.shape_cast %19 : vector<24xf32> to vector<24x1xf32>
      %c0_9 = arith.constant 0 : index
      %c0_10 = arith.constant 0 : index
      %21 = vector.load %arg15[%c0_9, %c0_10] : memref<24x1xf32, #tpu.memory_space<vmem>>, vector<24x1xf32>
      %cst_11 = arith.constant 1.000000e+00 : f32
      %22 = vector.broadcast %cst_11 : f32 to vector<24x1xf32>
      %23 = arith.subf %22, %21 : vector<24x1xf32>
      %c0_12 = arith.constant 0 : index
      %c0_13 = arith.constant 0 : index
      %24 = vector.load %arg14[%c0_12, %c0_13] : memref<24x1xf32, #tpu.memory_space<vmem>>, vector<24x1xf32>
      %25 = arith.divf %23, %24 : vector<24x1xf32>
      %26 = arith.index_cast %13 : i32 to index
      %c0_14 = arith.constant 0 : index
      %c0_15 = arith.constant 0 : index
      %27 = vector.load %arg12[%26, %c0_14, %c0_15] : memref<1x24x384xf32, #tpu.memory_space<vmem>>, vector<1x24x384xf32>
      %28 = vector.shape_cast %27 : vector<1x24x384xf32> to vector<24x384xf32>
      %c0_16 = arith.constant 0 : index
      %c0_17 = arith.constant 0 : index
      %29 = vector.load %arg13[%c0_16, %c0_17] : memref<24x1xf32, #tpu.memory_space<vmem>>, vector<24x1xf32>
      %30 = arith.subf %20, %29 : vector<24x1xf32>
      %31 = math.exp %30 : vector<24x1xf32>
      %32 = arith.mulf %31, %25 : vector<24x1xf32>
      %33 = vector.broadcast %32 : vector<24x1xf32> to vector<24x384xf32>
      %34 = arith.mulf %28, %33 : vector<24x384xf32>
      %c0_18 = arith.constant 0 : index
      %c0_19 = arith.constant 0 : index
      %c0_20 = arith.constant 0 : index
      %35 = vector.load %arg10[%c0_18, %c0_19, %c0_20] : memref<1x24x384xf32, #tpu.memory_space<vmem>>, vector<1x24x384xf32>
      %36 = vector.shape_cast %35 : vector<1x24x384xf32> to vector<24x384xf32>
      %37 = vector.shape_cast %34 : vector<24x384xf32> to vector<1x24x384xf32>
      tpu.vector_store %arg10[%c0_18, %c0_19, %c0_20], %37 {strides = array<i32>} : memref<1x24x384xf32, #tpu.memory_space<vmem>>, vector<1x24x384xf32>,
    } else {
    }
    %c1_i32_4 = arith.constant 1 : i32
    %10 = arith.cmpi eq, %arg2, %c1_i32_4 : i32
    %11 = arith.extui %10 : i1 to i32
    %c0_i32_5 = arith.constant 0 : i32
    %12 = arith.cmpi ne, %11, %c0_i32_5 : i32
    scf.if %12 {
      %c0 = arith.constant 0 : index
      %c0_6 = arith.constant 0 : index
      %c0_7 = arith.constant 0 : index
      %13 = vector.load %arg8[%c0, %c0_6, %c0_7] : memref<1x24x16xf32, #tpu.memory_space<vmem>>, vector<1x24x16xf32>
      %14 = vector.shape_cast %13 : vector<1x24x16xf32> to vector<24x16xf32>
      %c0_8 = arith.constant 0 : index
      %c0_9 = arith.constant 0 : index
      %15 = vector.load %arg15[%c0_8, %c0_9] : memref<24x1xf32, #tpu.memory_space<vmem>>, vector<24x1xf32>
      %16 = vector.broadcast %15 : vector<24x1xf32> to vector<24x16xf32>
      %17 = arith.mulf %14, %16 : vector<24x16xf32>
      %c0_10 = arith.constant 0 : index
      %c0_11 = arith.constant 0 : index
      %c0_12 = arith.constant 0 : index
      %18 = vector.load %arg9[%c0_10, %c0_11, %c0_12] : memref<1x16x128xf32, #tpu.memory_space<vmem>>, vector<1x16x128xf32>
      %19 = vector.shape_cast %18 : vector<1x16x128xf32> to vector<16x128xf32>
      %cst = arith.constant dense<0.000000e+00> : vector<24x128xf32>
      %20 = tpu.matmul %17, %19, %cst {dimension_numbers = #tpu.dot_dimension_numbers<[1], [0], [0], [1], [0, 0, 1, 1], [], []>} : vector<24x16xf32>, vector<16x128xf32>, vector<24x128xf32> -> vector<24x128xf32>
      %c0_13 = arith.constant 0 : index
      %c0_14 = arith.constant 0 : index
      %c0_15 = arith.constant 0 : index
      %21 = vector.load %arg11[%c0_13, %c0_14, %c0_15] : memref<1x24x128xf32, #tpu.memory_space<vmem>>, vector<1x24x128xf32>
      %22 = vector.shape_cast %21 : vector<1x24x128xf32> to vector<24x128xf32>
      %23 = vector.shape_cast %20 : vector<24x128xf32> to vector<1x24x128xf32>
      tpu.vector_store %arg11[%c0_13, %c0_14, %c0_15], %23 {strides = array<i32>} : memref<1x24x128xf32, #tpu.memory_space<vmem>>, vector<1x24x128xf32>,
    } else {
    }
    return
  }
  func.func @transform_0(%arg0: i32, %arg1: i32, %arg2: i32) -> (i32, i32, i32) {
    %c0_i32 = arith.constant 0 : i32
    %c0_i32_0 = arith.constant 0 : i32
    return %arg0, %arg1, %c0_i32 : i32, i32, i32
  }
  func.func @transform_1(%arg0: i32, %arg1: i32, %arg2: i32) -> (i32, i32) {
    %c0_i32 = arith.constant 0 : i32
    %0 = arith.minsi %arg2, %c0_i32 : i32
    %c0_i32_0 = arith.constant 0 : i32
    %c0_i32_1 = arith.constant 0 : i32
    return %c0_i32_0, %0 : i32, i32
  }
  func.func @transform_2(%arg0: i32, %arg1: i32, %arg2: i32) -> (i32, i32) {
    %c0_i32 = arith.constant 0 : i32
    %0 = arith.minsi %arg2, %c0_i32 : i32
    %c0_i32_0 = arith.constant 0 : i32
    %c0_i32_1 = arith.constant 0 : i32
    return %c0_i32_0, %0 : i32, i32
  }
  func.func @transform_3(%arg0: i32, %arg1: i32, %arg2: i32) -> (i32, i32) {
    %c0_i32 = arith.constant 0 : i32
    %c0_i32_0 = arith.constant 0 : i32
    %c0_i32_1 = arith.constant 0 : i32
    return %c0_i32, %c0_i32_0 : i32, i32
  }
  func.func @transform_4(%arg0: i32, %arg1: i32, %arg2: i32) -> (i32, i32) {
    %c0_i32 = arith.constant 0 : i32
    %c0_i32_0 = arith.constant 0 : i32
    %c0_i32_1 = arith.constant 0 : i32
    return %c0_i32, %c0_i32_0 : i32, i32
  }
  func.func @transform_5(%arg0: i32, %arg1: i32, %arg2: i32) -> (i32, i32, i32) {
    %c0_i32 = arith.constant 0 : i32
    %c0_i32_0 = arith.constant 0 : i32
    return %arg0, %arg1, %c0_i32 : i32, i32, i32
  }
  func.func @transform_6(%arg0: i32, %arg1: i32, %arg2: i32) -> (i32, i32, i32) {
    %c0_i32 = arith.constant 0 : i32
    %c0_i32_0 = arith.constant 0 : i32
    %c0_i32_1 = arith.constant 0 : i32
    return %arg0, %c0_i32, %c0_i32_0 : i32, i32, i32
  }
  func.func @transform_7(%arg0: i32, %arg1: i32, %arg2: i32) -> (i32, i32, i32) {
    %c1_i32 = arith.constant 1 : i32
    %0 = arith.subi %arg2, %c1_i32 : i32
    %c0_i32 = arith.constant 0 : i32
    %1 = arith.maxsi %0, %c0_i32 : i32
    %c0_i32_0 = arith.constant 0 : i32
    return %arg0, %arg1, %1 : i32, i32, i32
  }
  func.func @transform_8(%arg0: i32, %arg1: i32, %arg2: i32) -> (i32, i32, i32) {
    %c0_i32 = arith.constant 0 : i32
    %c0_i32_0 = arith.constant 0 : i32
    return %arg0, %arg1, %c0_i32 : i32, i32, i32
  }
}

</mosaic_0001>

<llo_original>
// kernel: tpu_custom_call.1
$region0: #{tpu_custom_call.1}
  #allocation0 [shape = 'u32[]', space=smem, size = 0x4, offset = 0x4, fixed_abs, tag = 'smem constant byte address 0x4 - core index']
  #allocation1 [shape = 'u32[72,128]{1,0:T(1,128)}', space=vmem, size = 0x9000, scoped, tag = 'internal scratch']
  #allocation2 [shape = 'f32[1,24,384]{2,1,0:T(8,128)}', space=vmem, size = 0x9000, scoped, tag = 'scratch operand']
  #allocation3 [shape = 'f32[24,1]{1,0:T(8,128)}', space=vmem, size = 0x3000, scoped, tag = 'scratch operand']
  #allocation4 [shape = 'f32[24,1]{1,0:T(8,128)}', space=vmem, size = 0x3000, scoped, tag = 'scratch operand']
  #allocation5 [shape = 'f32[24,1]{1,0:T(8,128)}', space=vmem, size = 0x3000, scoped, tag = 'scratch operand']
  #allocation6 [shape = 'f32[24,1]{1,0:T(8,128)}', space=vmem, size = 0x3000, scoped, tag = 'scratch operand']
  #allocation7 [shape = 'f32[1,1]{1,0:T(1,128)S(6)}', space=smem, size = 0x200, scoped, tag = 'scoped memory for tpu_custom_call.1']
  %s0 = inlined_call_operand.vmem [shape: bf16[2,24,64], index: 0, kind: input, shape index: {}]
  %s1 = inlined_call_operand.hbm [shape: bf16[64,384], index: 1, kind: input, shape index: {}]
  %s2 = inlined_call_operand.vmem [shape: f32[1,384], index: 2, kind: input, shape index: {}]
  %s3 = inlined_call_operand.vmem [shape: f32[1,64], index: 3, kind: input, shape index: {}]
  %s4 = inlined_call_operand.<no memory space> [shape: f32[1,1], index: 4, kind: input, shape index: {}]
  %s5 = inlined_call_operand.vmem [shape: f32[2,24,16], index: 5, kind: input, shape index: {}]
  %s6 = inlined_call_operand.vmem [shape: f32[2,16,128], index: 6, kind: input, shape index: {}]
  %s7 = inlined_call_operand.hbm [shape: f32[2,24,384], index: 7, kind: output, shape index: {0}]
  %s8 = inlined_call_operand.hbm [shape: f32[2,24,128], index: 8, kind: output, shape index: {1}]
  %9 = xla_tuple %s7, %s8
  %s10 = sld [smem:[#allocation0]]
  $region89: #{tpu_custom_call.1} parent=0
    _
  %s12 = ssub.s32 1, %s10
  %s13 = scalar_select 0, %s12, %s10
  %14 = sst [smem:[#allocation7]] %s4
  $region1: #{tpu_custom_call.1} parent=0
    #allocation8 [shape = 'u8[98304]{0}', space=vmem, size = 0x18000, scoped, tag = 'input window, operand 1']
    #allocation9 [shape = 's32[2]{0}', space=sflag, size = 0x8, scoped, tag = 'scoped memory for tpu_custom_call.1']
    #allocation10 [shape = 's32[2]{0}', space=sflag, size = 0x8, scoped, tag = 'scoped memory for tpu_custom_call.1']
    #allocation11 [shape = 'u8[73728]{0}', space=vmem, size = 0x12000, scoped, tag = 'output window, operand 0']
    #allocation12 [shape = 'u8[24576]{0}', space=vmem, size = 0x6000, scoped, tag = 'output window, operand 1']
    #allocation13 [shape = 's32[2]{0}', space=sflag, size = 0x8, scoped, tag = 'scoped memory for tpu_custom_call.1']
    %15 = vsyncpa [#allocation9], 0
    %s16 = scalar_lea.sflag [#allocation9], 1
    %17 = vsyncpa %s16, 0
    %18 = vsyncpa [#allocation10], 0
    %s19 = scalar_lea.sflag [#allocation10], 1
    %20 = vsyncpa %s19, 0
    %21 = vsyncpa [#allocation13], 0
    %s22 = scalar_lea.sflag [#allocation13], 1
    %23 = vsyncpa %s22, 0
    loop: start=0, step=1, limit=6
    $region2: #{tpu_custom_call.1} parent=1 // loop_pre_header
      _
    $region3: #{tpu_custom_call.1} parent=1 // loop_header
      %s25 = sphi 0, %s29
      %p26 = scmp.ge.s32.totalorder %s25, 6
      %s32 = sphi 0, %s51
      %s33 = sphi 0, %s47
      %s34 = sphi 0, %s43
      %s35 = sphi 0, %s32
      %s36 = sphi 0, %s33
      %s37 = sphi 0, %s34
      %s38 = sphi 0, %s35
      %s39 = sphi 0, %s36
      %s40 = sphi 0, %s37
      %s56 = sphi 0, %s58
      %s59 = sphi 0, %s56
      %s60 = sphi 0, %s59
      %s76 = sphi 0, %s60
      %s86 = sphi 0, %s88
      %s89 = sphi 0, %s86
      %s90 = sphi 0, %s89
      %s106 = sphi 0, %s90
      %s116 = sphi 0, %s118
      %s119 = sphi 0, %s116
      %s120 = sphi 0, %s119
      %s136 = sphi 0, %s120
      %s140 = sphi 0, %s140
      %s142 = sphi 0, %s140
      %s143 = sphi 0, %s142
      %s157 = sphi 0, %s143
      %s161 = sphi 0, %s161
      %s163 = sphi 0, %s161
      %s164 = sphi 0, %s163
      %s178 = sphi 0, %s164
      %s186 = sphi 0, %s188
      %s189 = sphi 0, %s186
      %s190 = sphi 0, %s189
      %s206 = sphi 0, %s190
      %s212 = sphi 0, %s214
      %s215 = sphi 0, %s212
      %s216 = sphi 0, %s215
      %s232 = sphi 0, %s216
      %s248 = sphi 0, %s250
      %s251 = sphi 0, %s248
      %s252 = sphi 0, %s251
      %s268 = sphi 0, %s252
      %s276 = sphi 0, %s278
      %s279 = sphi 0, %s276
      %s280 = sphi 0, %s279
      %s296 = sphi 0, %s280
    $region4: #{tpu_custom_call.1} parent=1 // loop_header_branch
      %28 = sbr.rel (%p26) target = $region8
    $region5: #{tpu_custom_call.1} parent=1 // loop_body
      %s30 = ssub.s32 %s25, 1
      %s31 = ssub.s32 %s25, 2
      %s41 = sadd.s32 1, %s34
      %p42 = scmp.ge.s32.totalorder %s41, 2
      %s43 = scalar_select %p42, 0, %s41
      %s44 = sadd.s32 1, %s33
      %s45 = scalar_select %p42, %s44, %s33
      %p46 = scmp.ge.s32.totalorder %s45, 1
      %s47 = scalar_select %p46, 0, %s45
      %s48 = sadd.s32 1, %s32
      %s49 = scalar_select %p46, %s48, %s32
      %p50 = scmp.ge.s32.totalorder %s49, 2
      %s51 = scalar_select %p50, 0, %s49
      %s52 = ssub.s32 %s32, %s51
      %s53 = ssub.s32 %s33, %s47
      %s54 = sor.u32 %s52, %s53
      %p55 = scmp.eq.s32.totalorder %s54, 0
      %s57 = sadd.s32 %s56, 1
      %s58 = scalar_select %p55, %s56, %s57
      %p61 = pneg %p55
      %p62 = scmp.eq.s32.totalorder %s25, 3
      %p63 = por %p61, %p62
      %p64 = scmp.ne.s32.totalorder %s56, %s59
      %p65 = scmp.eq.s32.totalorder %s25, 0
      %p66 = por %p64, %p65
      %p67 = scmp.ne.s32.totalorder %s56, %s59
      %p68 = scmp.eq.s32.totalorder %s30, 3
      %p69 = por %p67, %p68
      %p70 = scmp.ne.s32.totalorder %s59, %s60
      %p71 = scmp.eq.s32.totalorder %s30, 0
      %p72 = por %p70, %p71
      %p73 = scmp.ne.s32.totalorder %s59, %s60
      %p74 = scmp.eq.s32.totalorder %s31, 3
      %p75 = por %p73, %p74
      %p77 = scmp.ne.s32.totalorder %s60, %s76
      %p78 = scmp.eq.s32.totalorder %s31, 0
      %p79 = por %p77, %p78
      %p80 = scmp.lt.s32.totalorder %s34, 0
      %s81 = scalar_select %p80, %s34, 0
      %p82 = scmp.lt.s32.totalorder %s43, 0
      %s83 = scalar_select %p82, %s43, 0
      %s84 = ssub.s32 %s81, %s83
      %p85 = scmp.eq.s32.totalorder %s84, 0
      %s87 = sadd.s32 %s86, 1
      %s88 = scalar_select %p85, %s86, %s87
      %p91 = pneg %p85
      %p92 = scmp.eq.s32.totalorder %s25, 3
      %p93 = por %p91, %p92
      %p94 = scmp.ne.s32.totalorder %s86, %s89
      %p95 = scmp.eq.s32.totalorder %s25, 0
      %p96 = por %p94, %p95
      %p97 = scmp.ne.s32.totalorder %s86, %s89
      %p98 = scmp.eq.s32.totalorder %s30, 3
      %p99 = por %p97, %p98
      %p100 = scmp.ne.s32.totalorder %s89, %s90
      %p101 = scmp.eq.s32.totalorder %s30, 0
      %p102 = por %p100, %p101
      %p103 = scmp.ne.s32.totalorder %s89, %s90
      %p104 = scmp.eq.s32.totalorder %s31, 3
      %p105 = por %p103, %p104
      %p107 = scmp.ne.s32.totalorder %s90, %s106
      %p108 = scmp.eq.s32.totalorder %s31, 0
      %p109 = por %p107, %p108
      %p110 = scmp.lt.s32.totalorder %s34, 0
      %s111 = scalar_select %p110, %s34, 0
      %p112 = scmp.lt.s32.totalorder %s43, 0
      %s113 = scalar_select %p112, %s43, 0
      %s114 = ssub.s32 %s111, %s113
      %p115 = scmp.eq.s32.totalorder %s114, 0
      %s117 = sadd.s32 %s116, 1
      %s118 = scalar_select %p115, %s116, %s117
      %p121 = pneg %p115
      %p122 = scmp.eq.s32.totalorder %s25, 3
      %p123 = por %p121, %p122
      %p124 = scmp.ne.s32.totalorder %s116, %s119
      %p125 = scmp.eq.s32.totalorder %s25, 0
      %p126 = por %p124, %p125
      %p127 = scmp.ne.s32.totalorder %s116, %s119
      %p128 = scmp.eq.s32.totalorder %s30, 3
      %p129 = por %p127, %p128
      %p130 = scmp.ne.s32.totalorder %s119, %s120
      %p131 = scmp.eq.s32.totalorder %s30, 0
      %p132 = por %p130, %p131
      %p133 = scmp.ne.s32.totalorder %s119, %s120
      %p134 = scmp.eq.s32.totalorder %s31, 3
      %p135 = por %p133, %p134
      %p137 = scmp.ne.s32.totalorder %s120, %s136
      %p138 = scmp.eq.s32.totalorder %s31, 0
      %p139 = por %p137, %p138
      %s141 = sadd.s32 %s140, 1
      %p144 = scmp.eq.s32.totalorder %s25, 3
      %p145 = scmp.ne.s32.totalorder %s140, %s142
      %p146 = scmp.eq.s32.totalorder %s25, 0
      %p147 = por %p145, %p146
      %p148 = scmp.ne.s32.totalorder %s140, %s142
      %p149 = scmp.eq.s32.totalorder %s30, 3
      %p150 = por %p148, %p149
      %p151 = scmp.ne.s32.totalorder %s142, %s143
      %p152 = scmp.eq.s32.totalorder %s30, 0
      %p153 = por %p151, %p152
      %p154 = scmp.ne.s32.totalorder %s142, %s143
      %p155 = scmp.eq.s32.totalorder %s31, 3
      %p156 = por %p154, %p155
      %p158 = scmp.ne.s32.totalorder %s143, %s157
      %p159 = scmp.eq.s32.totalorder %s31, 0
      %p160 = por %p158, %p159
      %s162 = sadd.s32 %s161, 1
      %p165 = scmp.eq.s32.totalorder %s25, 3
      %p166 = scmp.ne.s32.totalorder %s161, %s163
      %p167 = scmp.eq.s32.totalorder %s25, 0
      %p168 = por %p166, %p167
      %p169 = scmp.ne.s32.totalorder %s161, %s163
      %p170 = scmp.eq.s32.totalorder %s30, 3
      %p171 = por %p169, %p170
      %p172 = scmp.ne.s32.totalorder %s163, %s164
      %p173 = scmp.eq.s32.totalorder %s30, 0
      %p174 = por %p172, %p173
      %p175 = scmp.ne.s32.totalorder %s163, %s164
      %p176 = scmp.eq.s32.totalorder %s31, 3
      %p177 = por %p175, %p176
      %p179 = scmp.ne.s32.totalorder %s164, %s178
      %p180 = scmp.eq.s32.totalorder %s31, 0
      %p181 = por %p179, %p180
      %s182 = ssub.s32 %s32, %s51
      %s183 = ssub.s32 %s33, %s47
      %s184 = sor.u32 %s182, %s183
      %p185 = scmp.eq.s32.totalorder %s184, 0
      %s187 = sadd.s32 %s186, 1
      %s188 = scalar_select %p185, %s186, %s187
      %p191 = pneg %p185
      %p192 = scmp.eq.s32.totalorder %s25, 3
      %p193 = por %p191, %p192
      %p194 = scmp.ne.s32.totalorder %s186, %s189
      %p195 = scmp.eq.s32.totalorder %s25, 0
      %p196 = por %p194, %p195
      %p197 = scmp.ne.s32.totalorder %s186, %s189
      %p198 = scmp.eq.s32.totalorder %s30, 3
      %p199 = por %p197, %p198
      %p200 = scmp.ne.s32.totalorder %s189, %s190
      %p201 = scmp.eq.s32.totalorder %s30, 0
      %p202 = por %p200, %p201
      %p203 = scmp.ne.s32.totalorder %s189, %s190
      %p204 = scmp.eq.s32.totalorder %s31, 3
      %p205 = por %p203, %p204
      %p207 = scmp.ne.s32.totalorder %s190, %s206
      %p208 = scmp.eq.s32.totalorder %s31, 0
      %p209 = por %p207, %p208
      %s210 = ssub.s32 %s32, %s51
      %p211 = scmp.eq.s32.totalorder %s210, 0
      %s213 = sadd.s32 %s212, 1
      %s214 = scalar_select %p211, %s212, %s213
      %p217 = pneg %p211
      %p218 = scmp.eq.s32.totalorder %s25, 3
      %p219 = por %p217, %p218
      %p220 = scmp.ne.s32.totalorder %s212, %s215
      %p221 = scmp.eq.s32.totalorder %s25, 0
      %p222 = por %p220, %p221
      %p223 = scmp.ne.s32.totalorder %s212, %s215
      %p224 = scmp.eq.s32.totalorder %s30, 3
      %p225 = por %p223, %p224
      %p226 = scmp.ne.s32.totalorder %s215, %s216
      %p227 = scmp.eq.s32.totalorder %s30, 0
      %p228 = por %p226, %p227
      %p229 = scmp.ne.s32.totalorder %s215, %s216
      %p230 = scmp.eq.s32.totalorder %s31, 3
      %p231 = por %p229, %p230
      %p233 = scmp.ne.s32.totalorder %s216, %s232
      %p234 = scmp.eq.s32.totalorder %s31, 0
      %p235 = por %p233, %p234
      %s236 = ssub.s32 %s34, 1
      %p237 = scmp.gt.s32.totalorder %s236, 0
      %s238 = scalar_select %p237, %s236, 0
      %s239 = ssub.s32 %s43, 1
      %p240 = scmp.gt.s32.totalorder %s239, 0
      %s241 = scalar_select %p240, %s239, 0
      %s242 = ssub.s32 %s32, %s51
      %s243 = ssub.s32 %s33, %s47
      %s244 = sor.u32 %s242, %s243
      %s245 = ssub.s32 %s238, %s241
      %s246 = sor.u32 %s244, %s245
      %p247 = scmp.eq.s32.totalorder %s246, 0
      %s249 = sadd.s32 %s248, 1
      %s250 = scalar_select %p247, %s248, %s249
      %p253 = pneg %p247
      %p254 = scmp.eq.s32.totalorder %s25, 3
      %p255 = por %p253, %p254
      %p256 = scmp.ne.s32.totalorder %s248, %s251
      %p257 = scmp.eq.s32.totalorder %s25, 0
      %p258 = por %p256, %p257
      %p259 = scmp.ne.s32.totalorder %s248, %s251
      %p260 = scmp.eq.s32.totalorder %s30, 3
      %p261 = por %p259, %p260
      %p262 = scmp.ne.s32.totalorder %s251, %s252
      %p263 = scmp.eq.s32.totalorder %s30, 0
      %p264 = por %p262, %p263
      %p265 = scmp.ne.s32.totalorder %s251, %s252
      %p266 = scmp.eq.s32.totalorder %s31, 3
      %p267 = por %p265, %p266
      %p269 = scmp.ne.s32.totalorder %s252, %s268
      %p270 = scmp.eq.s32.totalorder %s31, 0
      %p271 = por %p269, %p270
      %s272 = ssub.s32 %s32, %s51
      %s273 = ssub.s32 %s33, %s47
      %s274 = sor.u32 %s272, %s273
      %p275 = scmp.eq.s32.totalorder %s274, 0
      %s277 = sadd.s32 %s276, 1
      %s278 = scalar_select %p275, %s276, %s277
      %p281 = pneg %p275
      %p282 = scmp.eq.s32.totalorder %s25, 3
      %p283 = por %p281, %p282
      %p284 = scmp.ne.s32.totalorder %s276, %s279
      %p285 = scmp.eq.s32.totalorder %s25, 0
      %p286 = por %p284, %p285
      %p287 = scmp.ne.s32.totalorder %s276, %s279
      %p288 = scmp.eq.s32.totalorder %s30, 3
      %p289 = por %p287, %p288
      %p290 = scmp.ne.s32.totalorder %s279, %s280
      %p291 = scmp.eq.s32.totalorder %s30, 0
      %p292 = por %p290, %p291
      %p293 = scmp.ne.s32.totalorder %s279, %s280
      %p294 = scmp.eq.s32.totalorder %s31, 3
      %p295 = por %p293, %p294
      %p297 = scmp.ne.s32.totalorder %s280, %s296
      %p298 = scmp.eq.s32.totalorder %s31, 0
      %p299 = por %p297, %p298
      %p300 = scmp.le.s32.totalorder 1, %s25
      %p301 = scmp.lt.s32.totalorder %s25, 5
      %p302 = pnand %p300, %p301
      %p303 = pneg %p302
      // Predicated region
      $region9: #{tpu_custom_call.1} parent=5 // pred_check
        _
      $region10: #{tpu_custom_call.1} parent=5 // pred_check_branch
        %305 = sbr.rel (%p302) target = $region12
      $region11: #{tpu_custom_call.1} parent=5 // pred_region
        %s306 = ssub.s32 %s25, 1
        // Predicated region
        $region13: #{tpu_custom_call.1} parent=11 // pred_check
          %p307 = pneg %p153
        $region14: #{tpu_custom_call.1} parent=11 // pred_check_branch
          %309 = sbr.rel (%p307) target = $region16
        $region15: #{tpu_custom_call.1} parent=11 // pred_region
          _
        $region16: #{tpu_custom_call.1} parent=11 // pred_fallthru
          _
        // Predicated region
        $region17: #{tpu_custom_call.1} parent=11 // pred_check
          %p310 = pneg %p174
        $region18: #{tpu_custom_call.1} parent=11 // pred_check_branch
          %312 = sbr.rel (%p310) target = $region20
        $region19: #{tpu_custom_call.1} parent=11 // pred_region
          _
        $region20: #{tpu_custom_call.1} parent=11 // pred_fallthru
          _
      $region12: #{tpu_custom_call.1} parent=5 // pred_fallthru
        _
      %p313 = scmp.lt.s32.totalorder %s25, 4
      // Predicated region
      $region21: #{tpu_custom_call.1} parent=5 // pred_check
        %p314 = pneg %p313
      $region22: #{tpu_custom_call.1} parent=5 // pred_check_branch
        %316 = sbr.rel (%p314) target = $region24
      $region23: #{tpu_custom_call.1} parent=5 // pred_region
        // Predicated region
        $region25: #{tpu_custom_call.1} parent=23 // pred_check
          %p317 = pneg %p66
        $region26: #{tpu_custom_call.1} parent=23 // pred_check_branch
          %319 = sbr.rel (%p317) target = $region28
        $region27: #{tpu_custom_call.1} parent=23 // pred_region
          %s320 = smul.u32 3, %s33
          %p321 = scmp.lt.s32.totalorder %s32, 1
          %s322 = scalar_select %p321, %s32, 1
          %p323 = scmp.lt.s32.totalorder %s320, 2
          %s324 = scalar_select %p323, %s320, 2
          %s325 = smul.addr %s322, 3
          %s326 = sadd.s32 %s324, %s325
          %s327 = smul.addr %s326, 4
          %s328 = scalar_lea.vmem %s0, %s327
          %s329 = smul.u32 3, %s33
        $region28: #{tpu_custom_call.1} parent=23 // pred_fallthru
          _
        // Predicated region
        $region29: #{tpu_custom_call.1} parent=23 // pred_check
          %p330 = pneg %p96
        $region30: #{tpu_custom_call.1} parent=23 // pred_check_branch
          %332 = sbr.rel (%p330) target = $region32
        $region31: #{tpu_custom_call.1} parent=23 // pred_region
          %s333 = sand.u32 %s86, 1
          %s334 = scalar_lea.sflag [#allocation9], %s333
          %s335 = sand.u32 %s86, 1
          %s336 = smul.addr %s335, 96
          %s337 = scalar_lea.vmem [#allocation8], %s336
          %p338 = scmp.lt.s32.totalorder %s34, 0
          %s339 = scalar_select %p338, %s34, 0
          %s340 = smul.u32 3, %s339
          %342 = vsyncadd %s334, 0
          %s343 = smul.addr %s340, 4
          %s344 = scalar_lea.hbm %s1, %s343
          %s345 = sshll.u32 %s344, 4
          %s346 = int_to_ptr.hbm [resolvable:$true] %s345
          %s347 = sshll.u32 %s337, 4
          %s348 = int_to_ptr.vmem [resolvable:$true] %s347
          %353 = dma.hbm_to_vmem [thread:$0]  %s346, 1536, %s348, %s334, 192, 192, 12
        $region32: #{tpu_custom_call.1} parent=23 // pred_fallthru
          _
        // Predicated region
        $region33: #{tpu_custom_call.1} parent=23 // pred_check
          %p354 = pneg %p126
        $region34: #{tpu_custom_call.1} parent=23 // pred_check_branch
          %356 = sbr.rel (%p354) target = $region36
        $region35: #{tpu_custom_call.1} parent=23 // pred_region
          %p357 = scmp.lt.s32.totalorder %s34, 0
          %s358 = scalar_select %p357, %s34, 0
          %s359 = smul.u32 3, %s358
          %p360 = scmp.lt.s32.totalorder %s359, 2
          %s361 = scalar_select %p360, %s359, 2
          %s362 = scalar_lea.vmem %s2, %s361
          %p363 = scmp.lt.s32.totalorder %s34, 0
          %s364 = scalar_select %p363, %s34, 0
          %s365 = smul.u32 3, %s364
        $region36: #{tpu_custom_call.1} parent=23 // pred_fallthru
          _
        // Predicated region
        $region37: #{tpu_custom_call.1} parent=23 // pred_check
          %p366 = pneg %p196
        $region38: #{tpu_custom_call.1} parent=23 // pred_check_branch
          %368 = sbr.rel (%p366) target = $region40
        $region39: #{tpu_custom_call.1} parent=23 // pred_region
          %s369 = smul.u32 3, %s33
          %p370 = scmp.lt.s32.totalorder %s32, 1
          %s371 = scalar_select %p370, %s32, 1
          %p372 = scmp.lt.s32.totalorder %s369, 2
          %s373 = scalar_select %p372, %s369, 2
          %s374 = smul.addr %s371, 3
          %s375 = sadd.s32 %s373, %s374
          %s376 = smul.addr %s375, 8
          %s377 = scalar_lea.vmem %s5, %s376
          %s378 = smul.u32 3, %s33
        $region40: #{tpu_custom_call.1} parent=23 // pred_fallthru
          _
        // Predicated region
        $region41: #{tpu_custom_call.1} parent=23 // pred_check
          %p379 = pneg %p222
        $region42: #{tpu_custom_call.1} parent=23 // pred_check_branch
          %381 = sbr.rel (%p379) target = $region44
        $region43: #{tpu_custom_call.1} parent=23 // pred_region
          %p382 = scmp.lt.s32.totalorder %s32, 1
          %s383 = scalar_select %p382, %s32, 1
          %s384 = smul.addr %s383, 2
          %s385 = smul.addr %s384, 8
          %s386 = scalar_lea.vmem %s6, %s385
        $region44: #{tpu_custom_call.1} parent=23 // pred_fallthru
          _
      $region24: #{tpu_custom_call.1} parent=5 // pred_fallthru
        _
      %p387 = scmp.le.s32.totalorder 1, %s25
      %p388 = scmp.lt.s32.totalorder %s25, 5
      %p389 = pnand %p387, %p388
      %p390 = pneg %p389
      // Predicated region
      $region45: #{tpu_custom_call.1} parent=5 // pred_check
        _
      $region46: #{tpu_custom_call.1} parent=5 // pred_check_branch
        %392 = sbr.rel (%p389) target = $region48
      $region47: #{tpu_custom_call.1} parent=5 // pred_region
        %s393 = ssub.s32 %s25, 1
        %s394 = sand.u32 %s89, 1
        %s395 = scalar_lea.sflag [#allocation9], %s394
        %s396 = sand.u32 %s89, 1
        %s397 = smul.addr %s396, 96
        %s398 = scalar_lea.vmem [#allocation8], %s397
        // Predicated region
        $region49: #{tpu_custom_call.1} parent=47 // pred_check
          %p399 = pneg %p102
        $region50: #{tpu_custom_call.1} parent=47 // pred_check_branch
          %401 = sbr.rel (%p399) target = $region52
        $region51: #{tpu_custom_call.1} parent=47 // pred_region
          %403 = dma.done %s395, 1536
        $region52: #{tpu_custom_call.1} parent=47 // pred_fallthru
          _
        %s404 = smul.u32 3, %s36
        %p405 = scmp.lt.s32.totalorder %s35, 1
        %s406 = scalar_select %p405, %s35, 1
        %p407 = scmp.lt.s32.totalorder %s404, 2
        %s408 = scalar_select %p407, %s404, 2
        %s409 = smul.addr %s406, 3
        %s410 = sadd.s32 %s408, %s409
        %s411 = smul.addr %s410, 4
        %s412 = scalar_lea.vmem %s0, %s411
        %p413 = pneg %p72
        %p414 = pneg %p69
        %s415 = sand.u32 %s89, 1
        %s416 = scalar_lea.sflag [#allocation9], %s415
        %s417 = sand.u32 %s89, 1
        %s418 = smul.addr %s417, 96
        %s419 = scalar_lea.vmem [#allocation8], %s418
        %p420 = pneg %p102
        %p421 = pneg %p99
        %p422 = scmp.lt.s32.totalorder %s37, 0
        %s423 = scalar_select %p422, %s37, 0
        %s424 = smul.u32 3, %s423
        %p425 = scmp.lt.s32.totalorder %s424, 2
        %s426 = scalar_select %p425, %s424, 2
        %s427 = scalar_lea.vmem %s2, %s426
        %p428 = pneg %p132
        %p429 = pneg %p129
        %p430 = pneg %p153
        %p431 = pneg %p150
        %p432 = pneg %p174
        %p433 = pneg %p171
        %s434 = smul.u32 3, %s36
        %p435 = scmp.lt.s32.totalorder %s35, 1
        %s436 = scalar_select %p435, %s35, 1
        %p437 = scmp.lt.s32.totalorder %s434, 2
        %s438 = scalar_select %p437, %s434, 2
        %s439 = smul.addr %s436, 3
        %s440 = sadd.s32 %s438, %s439
        %s441 = smul.addr %s440, 8
        %s442 = scalar_lea.vmem %s5, %s441
        %p443 = pneg %p202
        %p444 = pneg %p199
        %p445 = scmp.lt.s32.totalorder %s35, 1
        %s446 = scalar_select %p445, %s35, 1
        %s447 = smul.addr %s446, 2
        %s448 = smul.addr %s447, 8
        %s449 = scalar_lea.vmem %s6, %s448
        %p450 = pneg %p228
        %p451 = pneg %p225
        %p452 = pneg %p264
        %p453 = pneg %p261
        %s454 = sand.u32 %s251, 1
        %s455 = scalar_lea.sflag [#allocation10], %s454
        %s456 = sand.u32 %s251, 1
        %s457 = smul.addr %s456, 72
        %s458 = scalar_lea.vmem [#allocation11], %s457
        %p459 = pneg %p292
        %p460 = pneg %p289
        %s461 = sand.u32 %s279, 1
        %s462 = scalar_lea.sflag [#allocation13], %s461
        %s463 = sand.u32 %s279, 1
        %s464 = smul.addr %s463, 24
        %s465 = scalar_lea.vmem [#allocation12], %s464
        %s466 = smul.u32 3, %s36
        %p467 = scmp.lt.s32.totalorder %s35, 1
        %s468 = scalar_select %p467, %s35, 1
        %p469 = scmp.lt.s32.totalorder %s466, 2
        %s470 = scalar_select %p469, %s466, 2
        %s471 = smul.addr %s468, 3
        %s472 = sadd.s32 %s470, %s471
        %s473 = smul.addr %s472, 4
        %s474 = scalar_lea.vmem %s0, %s473
        %s475 = smul.u32 3, %s36
        %p476 = scmp.lt.s32.totalorder %s37, 0
        %s477 = scalar_select %p476, %s37, 0
        %s478 = smul.u32 3, %s477
        %p479 = scmp.lt.s32.totalorder %s37, 0
        %s480 = scalar_select %p479, %s37, 0
        %s481 = smul.u32 3, %s480
        %p482 = scmp.lt.s32.totalorder %s481, 2
        %s483 = scalar_select %p482, %s481, 2
        %s484 = scalar_lea.vmem %s2, %s483
        %p485 = scmp.lt.s32.totalorder %s37, 0
        %s486 = scalar_select %p485, %s37, 0
        %s487 = smul.u32 3, %s486
        %s488 = smul.u32 3, %s36
        %p489 = scmp.lt.s32.totalorder %s35, 1
        %s490 = scalar_select %p489, %s35, 1
        %p491 = scmp.lt.s32.totalorder %s488, 2
        %s492 = scalar_select %p491, %s488, 2
        %s493 = smul.addr %s490, 3
        %s494 = sadd.s32 %s492, %s493
        %s495 = smul.addr %s494, 8
        %s496 = scalar_lea.vmem %s5, %s495
        %s497 = smul.u32 3, %s36
        %p498 = scmp.lt.s32.totalorder %s35, 1
        %s499 = scalar_select %p498, %s35, 1
        %s500 = smul.addr %s499, 2
        %s501 = smul.addr %s500, 8
        %s502 = scalar_lea.vmem %s6, %s501
        %s503 = ssub.s32 %s37, 1
        %p504 = scmp.gt.s32.totalorder %s503, 0
        %s505 = scalar_select %p504, %s503, 0
        %s506 = smul.u32 3, %s36
        %s507 = smul.u32 3, %s505
        %s508 = smul.u32 3, %s36
        %v510 = vlaneseq
        %v511 = vand.u32 %v510, 127
        %p512 = scmp.eq.s32.totalorder %s37, 0
        // Predicated region
        $region53: #{tpu_custom_call.1} parent=47 // pred_check
          %p513 = pneg %p512
        $region54: #{tpu_custom_call.1} parent=47 // pred_check_branch
          %515 = sbr.rel (%p513) target = $region56
        $region55: #{tpu_custom_call.1} parent=47 // pred_region
          %vm516 = vcmask 7168
          %517 = vst.msk [vmem:[#allocation3] sm:$0xff] %vm516, -1e+30
          %518 = vst.msk [vmem:[#allocation3 + $0x8] sm:$0xff] %vm516, -1e+30
          %519 = vst.msk [vmem:[#allocation3 + $0x10] sm:$0xff] %vm516, -1e+30
          %520 = vst.msk [vmem:[#allocation4] sm:$0xff] %vm516, 0.0
          %521 = vst.msk [vmem:[#allocation4 + $0x8] sm:$0xff] %vm516, 0.0
          %522 = vst.msk [vmem:[#allocation4 + $0x10] sm:$0xff] %vm516, 0.0
          %523 = vst.msk [vmem:[#allocation6] sm:$0xff] %vm516, 0.0
          %524 = vst.msk [vmem:[#allocation6 + $0x8] sm:$0xff] %vm516, 0.0
          %525 = vst.msk [vmem:[#allocation6 + $0x10] sm:$0xff] %vm516, 0.0
          %v526 = vld [vmem:[%s474] sm:$0xf]
          %v527 = vld [vmem:[%s474 + $0x4] sm:$0xf]
          %v528 = vld [vmem:[%s474 + $0x8] sm:$0xf]
          %v529 = vunpack.c.l.bf16 %v526
          %v530 = vunpack.c.l.bf16 %v527
          %v531 = vunpack.c.l.bf16 %v528
          %v532 = vld [vmem:[%s3] sm:$0x1]
          %v534 = vperm.slane %v532, 0
          %v536 = vmul.f32 %v529, %v534
          %v537 = vmul.f32 %v530, %v534
          %v538 = vmul.f32 %v531, %v534
          %vm539 = vcmask 523264
          %v540 = vsel %vm539, %v536, 0.0
          %541 = vadd.xlane.f32.xlu0 %v540
          %v542 = vpop.xlane.xlu0 %541
          %v543 = vsel %vm539, %v537, 0.0
          %544 = vadd.xlane.f32.xlu0 %v543
          %v545 = vpop.xlane.xlu0 %544
          %v546 = vsel %vm539, %v538, 0.0
          %547 = vadd.xlane.f32.xlu0 %v546
          %v548 = vpop.xlane.xlu0 %547
          %s549 = sld [smem:[#allocation7]]
          %v550 = vstv %s549
          %v551 = vadd.f32 %v542, %v550
          %v552 = vadd.f32 %v545, %v550
          %v553 = vadd.f32 %v548, %v550
          %v554 = vsub.f32 0.0, %v551
          %v555 = vsub.f32 0.0, %v552
          %v556 = vsub.f32 0.0, %v553
          %v557 = vmul.f32 %v554, 1.442695
          %v558 = vpow.pop %v557
          %v559 = vmul.f32 %v555, 1.442695
          %v560 = vpow.pop %v559
          %v561 = vmul.f32 %v556, 1.442695
          %v562 = vpow.pop %v561
          %v563 = vadd.f32 %v558, 1.0
          %v564 = vadd.f32 %v560, 1.0
          %v565 = vadd.f32 %v562, 1.0
          %v566 = vrcp.pop %v563
          %v567 = vmul.f32 %v563, %v566
          %v568 = vsub.f32 1.0, %v567
          %v569 = vmul.f32 %v566, %v568
          %v570 = vadd.f32 %v566, %v569
          %vm571 = vweird.f32 %v563
          %vm572 = vweird.f32 %v566
          %vm573 = vmor %vm571, %vm572
          %v574 = vsel %vm573, %v566, %v570
          %v575 = vand.u32 2147483647, %v563
          %vm576 = vcmp.eq.f32.partialorder %v575, 8.507059e+37
          %v577 = vand.u32 %v563, 2147483648
          %v578 = vor.u32 1.1754944e-38, %v577
          %v579 = vsel %vm576, %v578, %v574
          %v580 = vmul.f32 1.0, %v579
          %v581 = vrcp.pop %v564
          %v582 = vmul.f32 %v564, %v581
          %v583 = vsub.f32 1.0, %v582
          %v584 = vmul.f32 %v581, %v583
          %v585 = vadd.f32 %v581, %v584
          %vm586 = vweird.f32 %v564
          %vm587 = vweird.f32 %v581
          %vm588 = vmor %vm586, %vm587
          %v589 = vsel %vm588, %v581, %v585
          %v590 = vand.u32 2147483647, %v564
          %vm591 = vcmp.eq.f32.partialorder %v590, 8.507059e+37
          %v592 = vand.u32 %v564, 2147483648
          %v593 = vor.u32 1.1754944e-38, %v592
          %v594 = vsel %vm591, %v593, %v589
          %v595 = vmul.f32 1.0, %v594
          %v596 = vrcp.pop %v565
          %v597 = vmul.f32 %v565, %v596
          %v598 = vsub.f32 1.0, %v597
          %v599 = vmul.f32 %v596, %v598
          %v600 = vadd.f32 %v596, %v599
          %vm601 = vweird.f32 %v565
          %vm602 = vweird.f32 %v596
          %vm603 = vmor %vm601, %vm602
          %v604 = vsel %vm603, %v596, %v600
          %v605 = vand.u32 2147483647, %v565
          %vm606 = vcmp.eq.f32.partialorder %v605, 8.507059e+37
          %v607 = vand.u32 %v565, 2147483648
          %v608 = vor.u32 1.1754944e-38, %v607
          %v609 = vsel %vm606, %v608, %v604
          %v610 = vmul.f32 1.0, %v609
          %611 = vst.msk [vmem:[#allocation5] sm:$0xff] %vm516, %v580
          %612 = vst.msk [vmem:[#allocation5 + $0x8] sm:$0xff] %vm516, %v595
          %613 = vst.msk [vmem:[#allocation5 + $0x10] sm:$0xff] %vm516, %v610
        $region56: #{tpu_custom_call.1} parent=47 // pred_fallthru
          _
        %p614 = scmp.lt.s32.totalorder %s37, 1
        // Predicated region
        $region57: #{tpu_custom_call.1} parent=47 // pred_check
          %p615 = pneg %p614
        $region58: #{tpu_custom_call.1} parent=47 // pred_check_branch
          %617 = sbr.rel (%p615) target = $region60
        $region59: #{tpu_custom_call.1} parent=47 // pred_region
          %v618 = vld [vmem:[%s474] sm:$0xf]
          %v619 = vld [vmem:[%s474 + $0x4] sm:$0xf]
          %v620 = vld [vmem:[%s474 + $0x8] sm:$0xf]
          %v621 = vld [vmem:[%s398] sm:$0xff]
          %v622 = vld [vmem:[%s398 + $0x8] sm:$0xf]
          %v623 = vld [vmem:[%s398 + $0xc] sm:$0xff]
          %v624 = vld [vmem:[%s398 + $0x14] sm:$0xf]
          %v625 = vld [vmem:[%s398 + $0x18] sm:$0xff]
          %v626 = vld [vmem:[%s398 + $0x20] sm:$0xf]
          %v627 = vld [vmem:[%s398 + $0x24] sm:$0xff]
          %v628 = vld [vmem:[%s398 + $0x2c] sm:$0xf]
          %v629 = vld [vmem:[%s398 + $0x30] sm:$0xff]
          %v630 = vld [vmem:[%s398 + $0x38] sm:$0xf]
          %v631 = vld [vmem:[%s398 + $0x3c] sm:$0xff]
          %v632 = vld [vmem:[%s398 + $0x44] sm:$0xf]
          %v633 = vld [vmem:[%s398 + $0x48] sm:$0xff]
          %v634 = vld [vmem:[%s398 + $0x50] sm:$0xf]
          %v635 = vld [vmem:[%s398 + $0x54] sm:$0xff]
          %v636 = vld [vmem:[%s398 + $0x5c] sm:$0xf]
          %v637 = vld [vmem:[%s484] sm:$0x7]
          %v639 = vperm.slane %v637, 0
          %v640 = vperm.slane %v637, 1
          %v641 = vperm.slane %v637, 2
          %v648 = vunpack.c.l.b16 %v618
          %v649 = vunpack.c.l.b16 %v619
          %v650 = vunpack.c.l.b16 %v620
          %v651 = vpack.c.b16 %v649, %v648
          %v652 = vpack.c.b16 %v650, %v650
          %v669 = vunpack.c.l.b16 %v621
          %v670 = vunpack.c.h.b16 %v621
          %v671 = vunpack.c.l.b16 %v622
          %v672 = vunpack.c.l.b16 %v623
          %v673 = vunpack.c.h.b16 %v623
          %v674 = vunpack.c.l.b16 %v624
          %v675 = vunpack.c.l.b16 %v625
          %v676 = vunpack.c.h.b16 %v625
          %v677 = vunpack.c.l.b16 %v626
          %v678 = vunpack.c.l.b16 %v627
          %v679 = vunpack.c.h.b16 %v627
          %v680 = vunpack.c.l.b16 %v628
          %v681 = vunpack.c.l.b16 %v629
          %v682 = vunpack.c.h.b16 %v629
          %v683 = vunpack.c.l.b16 %v630
          %v684 = vunpack.c.l.b16 %v631
          %v685 = vunpack.c.h.b16 %v631
          %v686 = vunpack.c.l.b16 %v632
          %v687 = vunpack.c.l.b16 %v633
          %v688 = vunpack.c.h.b16 %v633
          %v689 = vunpack.c.l.b16 %v634
          %v690 = vunpack.c.l.b16 %v635
          %v691 = vunpack.c.h.b16 %v635
          %v692 = vunpack.c.l.b16 %v636
          %v693 = vpack.c.b16 %v672, %v669
          %v694 = vpack.c.b16 %v673, %v670
          %v695 = vpack.c.b16 %v674, %v671
          %v696 = vpack.c.b16 %v678, %v675
          %v697 = vpack.c.b16 %v679, %v676
          %v698 = vpack.c.b16 %v680, %v677
          %v699 = vpack.c.b16 %v684, %v681
          %v700 = vpack.c.b16 %v685, %v682
          %v701 = vpack.c.b16 %v686, %v683
          %v702 = vpack.c.b16 %v690, %v687
          %v703 = vpack.c.b16 %v691, %v688
          %v704 = vpack.c.b16 %v692, %v689
          %vm717 = vcmask 523264
          %v719 = vsel %vm717, %v651, 0
          %v722 = vsel %vm717, %v652, 0
          %724 = vmatpush.bf16.msra.mxu0 0
          %725 = vmatpush.bf16.msra.mxu0 0
          %726 = vmatpush.bf16.msra.mxu0 0
          %727 = vmatpush.bf16.msra.mxu0 0
          %728 = vmatpush.bf16.msra.mxu0 %v702
          %729 = vmatpush.bf16.msra.mxu0 %v699
          %730 = vmatpush.bf16.msra.mxu0 %v696
          %731 = vmatpush.bf16.msra.mxu0 %v693
          %732 = vmatmul.bf16.gmra.mxu0 %v719
          %v733 = vpop.f32.mrf.mxu0
          %v734 = vadd.f32 %v639, %v733
          %v735 = vpop.f32.mrf.mxu0
          %v736 = vadd.f32 %v639, %v735
          %737 = vmatmul.bf16.gmra.mxu0 %v722
          %v738 = vpop.f32.mrf.mxu0
          %v739 = vadd.f32 %v639, %v738
          %v740 = vpop.f32.mrf.mxu0
          %741 = vdwg.mxu0
          %742 = vmatpush.bf16.msra.mxu0 0
          %743 = vmatpush.bf16.msra.mxu0 0
          %744 = vmatpush.bf16.msra.mxu0 0
          %745 = vmatpush.bf16.msra.mxu0 0
          %746 = vmatpush.bf16.msra.mxu0 %v703
          %747 = vmatpush.bf16.msra.mxu0 %v700
          %748 = vmatpush.bf16.msra.mxu0 %v697
          %749 = vmatpush.bf16.msra.mxu0 %v694
          %750 = vmatmul.bf16.gmra.mxu0 %v719
          %v751 = vpop.f32.mrf.mxu0
          %v752 = vadd.f32 %v640, %v751
          %v753 = vpop.f32.mrf.mxu0
          %v754 = vadd.f32 %v640, %v753
          %755 = vmatmul.bf16.gmra.mxu0 %v722
          %v756 = vpop.f32.mrf.mxu0
          %v757 = vadd.f32 %v640, %v756
          %v758 = vpop.f32.mrf.mxu0
          %759 = vdwg.mxu0
          %760 = vmatpush.bf16.msra.mxu0 0
          %761 = vmatpush.bf16.msra.mxu0 0
          %762 = vmatpush.bf16.msra.mxu0 0
          %763 = vmatpush.bf16.msra.mxu0 0
          %764 = vmatpush.bf16.msra.mxu0 %v704
          %765 = vmatpush.bf16.msra.mxu0 %v701
          %766 = vmatpush.bf16.msra.mxu0 %v698
          %767 = vmatpush.bf16.msra.mxu0 %v695
          %768 = vmatmul.bf16.gmra.mxu0 %v719
          %v769 = vpop.f32.mrf.mxu0
          %v770 = vadd.f32 %v641, %v769
          %v771 = vpop.f32.mrf.mxu0
          %v772 = vadd.f32 %v641, %v771
          %773 = vmatmul.bf16.gmra.mxu0 %v722
          %v774 = vpop.f32.mrf.mxu0
          %v775 = vadd.f32 %v641, %v774
          %v776 = vpop.f32.mrf.mxu0
          %777 = vdwg.mxu0
          %v778 = vld [vmem:[#allocation3] sm:$0xff]
          %v779 = vld [vmem:[#allocation3 + $0x8] sm:$0xff]
          %v780 = vld [vmem:[#allocation3 + $0x10] sm:$0xff]
          %v781 = vmax.f32 %v734, %v770
          %v782 = vmax.f32 %v781, %v752
          %783 = vmax.xlane.f32.xlu0 %v782
          %v784 = vpop.xlane.xlu0 %783
          %v785 = vmax.f32 %v736, %v772
          %v786 = vmax.f32 %v785, %v754
          %787 = vmax.xlane.f32.xlu0 %v786
          %v788 = vpop.xlane.xlu0 %787
          %v789 = vmax.f32 %v739, %v775
          %v790 = vmax.f32 %v789, %v757
          %791 = vmax.xlane.f32.xlu0 %v790
          %v792 = vpop.xlane.xlu0 %791
          %v793 = vmax.f32 %v778, %v784
          %v794 = vmax.f32 %v779, %v788
          %v795 = vmax.f32 %v780, %v792
          %797 = vset.pattern.permute.xlu0 0
          %798 = vperm.xlu0 %797, %v793
          %v799 = vpop.permute.xlu0 %798
          %802 = vset.pattern.permute.xlu0 0
          %803 = vperm.xlu0 %802, %v794
          %v804 = vpop.permute.xlu0 %803
          %807 = vset.pattern.permute.xlu0 0
          %808 = vperm.xlu0 %807, %v795
          %v809 = vpop.permute.xlu0 %808
          %v811 = vsub.f32 %v734, %v799
          %v812 = vsub.f32 %v752, %v799
          %v813 = vsub.f32 %v770, %v799
          %v814 = vsub.f32 %v736, %v804
          %v815 = vsub.f32 %v754, %v804
          %v816 = vsub.f32 %v772, %v804
          %v817 = vsub.f32 %v739, %v809
          %v818 = vsub.f32 %v757, %v809
          %v819 = vsub.f32 %v775, %v809
          %v820 = vmul.f32 %v811, 1.442695
          %v821 = vpow.pop %v820
          %v822 = vmul.f32 %v812, 1.442695
          %v823 = vpow.pop %v822
          %v824 = vmul.f32 %v813, 1.442695
          %v825 = vpow.pop %v824
          %v826 = vmul.f32 %v814, 1.442695
          %v827 = vpow.pop %v826
          %v828 = vmul.f32 %v815, 1.442695
          %v829 = vpow.pop %v828
          %v830 = vmul.f32 %v816, 1.442695
          %v831 = vpow.pop %v830
          %v832 = vmul.f32 %v817, 1.442695
          %v833 = vpow.pop %v832
          %v834 = vmul.f32 %v818, 1.442695
          %v835 = vpow.pop %v834
          %v836 = vmul.f32 %v819, 1.442695
          %v837 = vpow.pop %v836
          %v838 = vld [vmem:[#allocation4] sm:$0xff]
          %v839 = vld [vmem:[#allocation4 + $0x8] sm:$0xff]
          %v840 = vld [vmem:[#allocation4 + $0x10] sm:$0xff]
          %v841 = vsub.f32 %v778, %v793
          %v842 = vsub.f32 %v779, %v794
          %v843 = vsub.f32 %v780, %v795
          %v844 = vmul.f32 %v841, 1.442695
          %v845 = vpow.pop %v844
          %v846 = vmul.f32 %v842, 1.442695
          %v847 = vpow.pop %v846
          %v848 = vmul.f32 %v843, 1.442695
          %v849 = vpow.pop %v848
          %v850 = vmul.f32 %v838, %v845
          %v851 = vmul.f32 %v839, %v847
          %v852 = vmul.f32 %v840, %v849
          %v853 = vadd.f32 %v821, %v823
          %v854 = vadd.f32 %v853, %v825
          %855 = vadd.xlane.f32.xlu0 %v854
          %v856 = vpop.xlane.xlu0 %855
          %v857 = vadd.f32 %v827, %v829
          %v858 = vadd.f32 %v857, %v831
          %859 = vadd.xlane.f32.xlu0 %v858
          %v860 = vpop.xlane.xlu0 %859
          %v861 = vadd.f32 %v833, %v835
          %v862 = vadd.f32 %v861, %v837
          %863 = vadd.xlane.f32.xlu0 %v862
          %v864 = vpop.xlane.xlu0 %863
          %v865 = vadd.f32 %v850, %v856
          %v866 = vadd.f32 %v851, %v860
          %v867 = vadd.f32 %v852, %v864
          %vm868 = vcmask 7168
          %869 = vst.msk [vmem:[#allocation4] sm:$0xff] %vm868, %v865
          %870 = vst.msk [vmem:[#allocation4 + $0x8] sm:$0xff] %vm868, %v866
          %871 = vst.msk [vmem:[#allocation4 + $0x10] sm:$0xff] %vm868, %v867
          %s872 = smul.u32 %s37, 9
          %s873 = smul.addr %s872, 8
          %s874 = scalar_lea.vmem [#allocation2], %s873
          %875 = vst [vmem:[%s874] sm:$0xff] %v821
          %876 = vst [vmem:[%s874 + $0x8] sm:$0xff] %v823
          %877 = vst [vmem:[%s874 + $0x10] sm:$0xff] %v825
          %878 = vst [vmem:[%s874 + $0x18] sm:$0xff] %v827
          %879 = vst [vmem:[%s874 + $0x20] sm:$0xff] %v829
          %880 = vst [vmem:[%s874 + $0x28] sm:$0xff] %v831
          %881 = vst [vmem:[%s874 + $0x30] sm:$0xff] %v833
          %882 = vst [vmem:[%s874 + $0x38] sm:$0xff] %v835
          %883 = vst [vmem:[%s874 + $0x40] sm:$0xff] %v837
          %v884 = vstv %s37
          %vm885 = vcmp.eq.s32.totalorder %v511, %v884
          %v886 = vld [vmem:[#allocation6] sm:$0xff]
          %v887 = vld [vmem:[#allocation6 + $0x8] sm:$0xff]
          %v888 = vld [vmem:[#allocation6 + $0x10] sm:$0xff]
          %v889 = vsel %vm885, %v793, %v886
          %v890 = vsel %vm885, %v794, %v887
          %v891 = vsel %vm885, %v795, %v888
          %892 = vst.msk [vmem:[#allocation6] sm:$0xff] %vm868, %v889
          %893 = vst.msk [vmem:[#allocation6 + $0x8] sm:$0xff] %vm868, %v890
          %894 = vst.msk [vmem:[#allocation6 + $0x10] sm:$0xff] %vm868, %v891
          %895 = vst.msk [vmem:[#allocation3] sm:$0xff] %vm868, %v793
          %896 = vst.msk [vmem:[#allocation3 + $0x8] sm:$0xff] %vm868, %v794
          %897 = vst.msk [vmem:[#allocation3 + $0x10] sm:$0xff] %vm868, %v795
        $region60: #{tpu_custom_call.1} parent=47 // pred_fallthru
          _
        %p898 = scmp.ge.s32.totalorder %s37, 1
        // Predicated region
        $region61: #{tpu_custom_call.1} parent=47 // pred_check
          %p899 = pneg %p898
        $region62: #{tpu_custom_call.1} parent=47 // pred_check_branch
          %901 = sbr.rel (%p899) target = $region64
        $region63: #{tpu_custom_call.1} parent=47 // pred_region
          %s902 = ssub.s32 %s37, 1
          %v903 = vstv %s902
          %vm904 = vcmp.eq.s32.totalorder %v511, %v903
          %v905 = vld [vmem:[#allocation6] sm:$0xff]
          %v906 = vld [vmem:[#allocation6 + $0x8] sm:$0xff]
          %v907 = vld [vmem:[#allocation6 + $0x10] sm:$0xff]
          %v908 = vsel %vm904, %v905, 0.0
          %v909 = vsel %vm904, %v906, 0.0
          %v910 = vsel %vm904, %v907, 0.0
          %v911 = vadd.f32 %v908, 0.0
          %v912 = vadd.f32 %v909, 0.0
          %v913 = vadd.f32 %v910, 0.0
          %v914 = vld [vmem:[#allocation5] sm:$0xff]
          %v915 = vld [vmem:[#allocation5 + $0x8] sm:$0xff]
          %v916 = vld [vmem:[#allocation5 + $0x10] sm:$0xff]
          %v917 = vsub.f32 1.0, %v914
          %v918 = vsub.f32 1.0, %v915
          %v919 = vsub.f32 1.0, %v916
          %v920 = vld [vmem:[#allocation4] sm:$0xff]
          %v921 = vld [vmem:[#allocation4 + $0x8] sm:$0xff]
          %v922 = vld [vmem:[#allocation4 + $0x10] sm:$0xff]
          %v923 = vrcp.pop %v920
          %v924 = vmul.f32 %v920, %v923
          %v925 = vsub.f32 1.0, %v924
          %v926 = vmul.f32 %v923, %v925
          %v927 = vadd.f32 %v923, %v926
          %vm928 = vweird.f32 %v920
          %vm929 = vweird.f32 %v923
          %vm930 = vmor %vm928, %vm929
          %v931 = vsel %vm930, %v923, %v927
          %v932 = vand.u32 2147483647, %v920
          %vm933 = vcmp.eq.f32.partialorder %v932, 8.507059e+37
          %v934 = vand.u32 %v920, 2147483648
          %v935 = vor.u32 1.1754944e-38, %v934
          %v936 = vsel %vm933, %v935, %v931
          %v937 = vmul.f32 %v917, %v936
          %v938 = vrcp.pop %v921
          %v939 = vmul.f32 %v921, %v938
          %v940 = vsub.f32 1.0, %v939
          %v941 = vmul.f32 %v938, %v940
          %v942 = vadd.f32 %v938, %v941
          %vm943 = vweird.f32 %v921
          %vm944 = vweird.f32 %v938
          %vm945 = vmor %vm943, %vm944
          %v946 = vsel %vm945, %v938, %v942
          %v947 = vand.u32 2147483647, %v921
          %vm948 = vcmp.eq.f32.partialorder %v947, 8.507059e+37
          %v949 = vand.u32 %v921, 2147483648
          %v950 = vor.u32 1.1754944e-38, %v949
          %v951 = vsel %vm948, %v950, %v946
          %v952 = vmul.f32 %v918, %v951
          %v953 = vrcp.pop %v922
          %v954 = vmul.f32 %v922, %v953
          %v955 = vsub.f32 1.0, %v954
          %v956 = vmul.f32 %v953, %v955
          %v957 = vadd.f32 %v953, %v956
          %vm958 = vweird.f32 %v922
          %vm959 = vweird.f32 %v953
          %vm960 = vmor %vm958, %vm959
          %v961 = vsel %vm960, %v953, %v957
          %v962 = vand.u32 2147483647, %v922
          %vm963 = vcmp.eq.f32.partialorder %v962, 8.507059e+37
          %v964 = vand.u32 %v922, 2147483648
          %v965 = vor.u32 1.1754944e-38, %v964
          %v966 = vsel %vm963, %v965, %v961
          %v967 = vmul.f32 %v919, %v966
          %s968 = smul.u32 %s902, 9
          %s969 = smul.addr %s968, 8
          %s970 = scalar_lea.vmem [#allocation2], %s969
          %v971 = vld [vmem:[%s970] sm:$0xff]
          %v972 = vld [vmem:[%s970 + $0x8] sm:$0xff]
          %v973 = vld [vmem:[%s970 + $0x10] sm:$0xff]
          %v974 = vld [vmem:[%s970 + $0x18] sm:$0xff]
          %v975 = vld [vmem:[%s970 + $0x20] sm:$0xff]
          %v976 = vld [vmem:[%s970 + $0x28] sm:$0xff]
          %v977 = vld [vmem:[%s970 + $0x30] sm:$0xff]
          %v978 = vld [vmem:[%s970 + $0x38] sm:$0xff]
          %v979 = vld [vmem:[%s970 + $0x40] sm:$0xff]
          %v980 = vld [vmem:[#allocation3] sm:$0xff]
          %v981 = vld [vmem:[#allocation3 + $0x8] sm:$0xff]
          %v982 = vld [vmem:[#allocation3 + $0x10] sm:$0xff]
          %v983 = vsub.f32 %v911, %v980
          %v984 = vsub.f32 %v912, %v981
          %v985 = vsub.f32 %v913, %v982
          %v986 = vmul.f32 %v983, 1.442695
          %v987 = vpow.pop %v986
          %v988 = vmul.f32 %v984, 1.442695
          %v989 = vpow.pop %v988
          %v990 = vmul.f32 %v985, 1.442695
          %v991 = vpow.pop %v990
          %v992 = vmul.f32 %v987, %v937
          %v993 = vmul.f32 %v989, %v952
          %v994 = vmul.f32 %v991, %v967
          %996 = vset.pattern.permute.xlu0 0
          %997 = vperm.xlu0 %996, %v992
          %v998 = vpop.permute.xlu0 %997
          %1001 = vset.pattern.permute.xlu0 0
          %1002 = vperm.xlu0 %1001, %v993
          %v1003 = vpop.permute.xlu0 %1002
          %1006 = vset.pattern.permute.xlu0 0
          %1007 = vperm.xlu0 %1006, %v994
          %v1008 = vpop.permute.xlu0 %1007
          %v1010 = vmul.f32 %v971, %v998
          %v1011 = vmul.f32 %v972, %v998
          %v1012 = vmul.f32 %v973, %v998
          %v1013 = vmul.f32 %v974, %v1003
          %v1014 = vmul.f32 %v975, %v1003
          %v1015 = vmul.f32 %v976, %v1003
          %v1016 = vmul.f32 %v977, %v1008
          %v1017 = vmul.f32 %v978, %v1008
          %v1018 = vmul.f32 %v979, %v1008
          %1019 = vst [vmem:[%s458] sm:$0xff] %v1010
          %1020 = vst [vmem:[%s458 + $0x8] sm:$0xff] %v1011
          %1021 = vst [vmem:[%s458 + $0x10] sm:$0xff] %v1012
          %1022 = vst [vmem:[%s458 + $0x18] sm:$0xff] %v1013
          %1023 = vst [vmem:[%s458 + $0x20] sm:$0xff] %v1014
          %1024 = vst [vmem:[%s458 + $0x28] sm:$0xff] %v1015
          %1025 = vst [vmem:[%s458 + $0x30] sm:$0xff] %v1016
          %1026 = vst [vmem:[%s458 + $0x38] sm:$0xff] %v1017
          %1027 = vst [vmem:[%s458 + $0x40] sm:$0xff] %v1018
        $region64: #{tpu_custom_call.1} parent=47 // pred_fallthru
          _
        %p1028 = scmp.eq.s32.totalorder %s37, 1
        // Predicated region
        $region65: #{tpu_custom_call.1} parent=47 // pred_check
          %p1029 = pneg %p1028
        $region66: #{tpu_custom_call.1} parent=47 // pred_check_branch
          %1031 = sbr.rel (%p1029) target = $region68
        $region67: #{tpu_custom_call.1} parent=47 // pred_region
          %v1032 = vld [vmem:[%s496] sm:$0xff]
          %v1033 = vld [vmem:[%s496 + $0x8] sm:$0xff]
          %v1034 = vld [vmem:[%s496 + $0x10] sm:$0xff]
          %v1035 = vld [vmem:[#allocation5] sm:$0xff]
          %v1036 = vld [vmem:[#allocation5 + $0x8] sm:$0xff]
          %v1037 = vld [vmem:[#allocation5 + $0x10] sm:$0xff]
          %1039 = vset.pattern.permute.xlu0 0
          %1040 = vperm.xlu0 %1039, %v1035
          %v1041 = vpop.permute.xlu0 %1040
          %1044 = vset.pattern.permute.xlu0 0
          %1045 = vperm.xlu0 %1044, %v1036
          %v1046 = vpop.permute.xlu0 %1045
          %1049 = vset.pattern.permute.xlu0 0
          %1050 = vperm.xlu0 %1049, %v1037
          %v1051 = vpop.permute.xlu0 %1050
          %v1053 = vmul.f32 %v1032, %v1041
          %v1054 = vmul.f32 %v1033, %v1046
          %v1055 = vmul.f32 %v1034, %v1051
          %v1056 = vld [vmem:[%s502] sm:$0xff]
          %v1057 = vld [vmem:[%s502 + $0x8] sm:$0xff]
          %vm1058 = vcmask 130048
          %v1060 = vsel %vm1058, %v1053, 0
          %v1063 = vsel %vm1058, %v1054, 0
          %v1066 = vsel %vm1058, %v1055, 0
          %1068 = vmatpush.msra.mxu0 0.0
          %1069 = vmatpush.msra.mxu0 0.0
          %1070 = vmatpush.msra.mxu0 0.0
          %1071 = vmatpush.msra.mxu0 0.0
          %1072 = vmatpush.msra.mxu0 0.0
          %1073 = vmatpush.msra.mxu0 0.0
          %1074 = vmatpush.msra.mxu0 0.0
          %1075 = vmatpush.msra.mxu0 0.0
          %1076 = vmatpush.msra.mxu0 0.0
          %1077 = vmatpush.msra.mxu0 0.0
          %1078 = vmatpush.msra.mxu0 0.0
          %1079 = vmatpush.msra.mxu0 0.0
          %1080 = vmatpush.msra.mxu0 0.0
          %1081 = vmatpush.msra.mxu0 0.0
          %1082 = vmatpush.msra.mxu0 %v1057
          %1083 = vmatpush.msra.mxu0 %v1056
          %1084 = vmatmul.f32.gmra.mxu0 %v1060
          %v1085 = vpop.f32.mrf.mxu0
          %v1086 = vadd.f32 0.0, %v1085
          %1087 = vmatmul.f32.gmra.mxu0 %v1063
          %v1088 = vpop.f32.mrf.mxu0
          %v1089 = vadd.f32 0.0, %v1088
          %1090 = vmatmul.f32.gmra.mxu0 %v1066
          %v1091 = vpop.f32.mrf.mxu0
          %v1092 = vadd.f32 0.0, %v1091
          %1093 = vdwg.mxu0
          %1094 = vst [vmem:[%s465] sm:$0xff] %v1086
          %1095 = vst [vmem:[%s465 + $0x8] sm:$0xff] %v1089
          %1096 = vst [vmem:[%s465 + $0x10] sm:$0xff] %v1092
        $region68: #{tpu_custom_call.1} parent=47 // pred_fallthru
          _
        %s1097 = sand.u32 %s251, 1
        %s1098 = scalar_lea.sflag [#allocation10], %s1097
        %s1099 = sand.u32 %s251, 1
        %s1100 = smul.addr %s1099, 72
        %s1101 = scalar_lea.vmem [#allocation11], %s1100
        %s1102 = sand.u32 %s279, 1
        %s1103 = scalar_lea.sflag [#allocation13], %s1102
        %s1104 = sand.u32 %s279, 1
        %s1105 = smul.addr %s1104, 24
        %s1106 = scalar_lea.vmem [#allocation12], %s1105
        // Predicated region
        $region69: #{tpu_custom_call.1} parent=47 // pred_check
          %p1107 = pneg %p261
        $region70: #{tpu_custom_call.1} parent=47 // pred_check_branch
          %1109 = sbr.rel (%p1107) target = $region72
        $region71: #{tpu_custom_call.1} parent=47 // pred_region
          %s1110 = ssub.s32 %s37, 1
          %p1111 = scmp.gt.s32.totalorder %s1110, 0
          %s1112 = scalar_select %p1111, %s1110, 0
          %s1113 = smul.u32 3, %s36
          %s1114 = smul.u32 3, %s1112
          %1116 = vsyncadd %s1098, 0
          %s1117 = smul.addr %s1113, 3
          %s1118 = sadd.s32 %s1114, %s1117
          %s1119 = smul.addr %s35, 9
          %s1120 = sadd.s32 %s1118, %s1119
          %s1121 = smul.addr %s1120, 8
          %s1122 = scalar_lea.hbm %s7, %s1121
          %s1123 = sshll.u32 %s1101, 4
          %s1124 = int_to_ptr.vmem [resolvable:$true] %s1123
          %s1125 = sshll.u32 %s1122, 4
          %s1126 = int_to_ptr.hbm [resolvable:$true] %s1125
          %1131 = dma.vmem_to_hbm [thread:$0]  %s1124, 1152, %s1126, %s1098, 384, 384, 24
        $region72: #{tpu_custom_call.1} parent=47 // pred_fallthru
          _
        // Predicated region
        $region73: #{tpu_custom_call.1} parent=47 // pred_check
          %p1132 = pneg %p289
        $region74: #{tpu_custom_call.1} parent=47 // pred_check_branch
          %1134 = sbr.rel (%p1132) target = $region76
        $region75: #{tpu_custom_call.1} parent=47 // pred_region
          %s1135 = smul.u32 3, %s36
          %1137 = vsyncadd %s1103, 0
          %s1138 = smul.addr %s35, 3
          %s1139 = sadd.s32 %s1135, %s1138
          %s1140 = smul.addr %s1139, 8
          %s1141 = scalar_lea.hbm %s8, %s1140
          %s1142 = sshll.u32 %s1106, 4
          %s1143 = int_to_ptr.vmem [resolvable:$true] %s1142
          %s1144 = sshll.u32 %s1141, 4
          %s1145 = int_to_ptr.hbm [resolvable:$true] %s1144
          %1150 = dma.vmem_to_hbm [thread:$0]  %s1143, 384, %s1145, %s1103, 128, 128, 8
        $region76: #{tpu_custom_call.1} parent=47 // pred_fallthru
          _
      $region48: #{tpu_custom_call.1} parent=5 // pred_fallthru
        _
      %p1151 = scmp.le.s32.totalorder 2, %s25
      // Predicated region
      $region77: #{tpu_custom_call.1} parent=5 // pred_check
        %p1152 = pneg %p1151
      $region78: #{tpu_custom_call.1} parent=5 // pred_check_branch
        %1154 = sbr.rel (%p1152) target = $region80
      $region79: #{tpu_custom_call.1} parent=5 // pred_region
        %s1155 = ssub.s32 %s25, 2
        // Predicated region
        $region81: #{tpu_custom_call.1} parent=79 // pred_check
          %p1156 = pneg %p267
        $region82: #{tpu_custom_call.1} parent=79 // pred_check_branch
          %1158 = sbr.rel (%p1156) target = $region84
        $region83: #{tpu_custom_call.1} parent=79 // pred_region
          %s1159 = sand.u32 %s252, 1
          %s1160 = scalar_lea.sflag [#allocation10], %s1159
          %s1161 = sand.u32 %s252, 1
          %s1162 = smul.addr %s1161, 72
          %s1163 = scalar_lea.vmem [#allocation11], %s1162
          %1165 = dma.done %s1160, 1152
        $region84: #{tpu_custom_call.1} parent=79 // pred_fallthru
          _
        // Predicated region
        $region85: #{tpu_custom_call.1} parent=79 // pred_check
          %p1166 = pneg %p295
        $region86: #{tpu_custom_call.1} parent=79 // pred_check_branch
          %1168 = sbr.rel (%p1166) target = $region88
        $region87: #{tpu_custom_call.1} parent=79 // pred_region
          %s1169 = sand.u32 %s280, 1
          %s1170 = scalar_lea.sflag [#allocation13], %s1169
          %s1171 = sand.u32 %s280, 1
          %s1172 = smul.addr %s1171, 24
          %s1173 = scalar_lea.vmem [#allocation12], %s1172
          %1175 = dma.done %s1170, 384
        $region88: #{tpu_custom_call.1} parent=79 // pred_fallthru
          _
      $region80: #{tpu_custom_call.1} parent=5 // pred_fallthru
        _
    $region6: #{tpu_custom_call.1} parent=1 // loop_footer
      %s29 = sadd.s32 1, %s25
    $region7: #{tpu_custom_call.1} parent=1 // loop_footer_branch
      %24 = sbr.rel target = $region3
    $region8: #{tpu_custom_call.1} parent=1 // loop_exit
      _
    %1176 = vsyncpa [#allocation9], 1
    %s1177 = scalar_lea.sflag [#allocation9], 1
    %1178 = vsyncpa %s1177, 1
    %1179 = vsyncpa [#allocation10], 1
    %s1180 = scalar_lea.sflag [#allocation10], 1
    %1181 = vsyncpa %s1180, 1
    %1182 = vsyncpa [#allocation13], 1
    %s1183 = scalar_lea.sflag [#allocation13], 1
    %1184 = vsyncpa %s1183, 1

</llo_original>
